<compile_context>
chip_gen: v5e
topology: v5e:2x2
jax: 0.10.0
libtpu: 0.0.40
codegen_flags: <defaults>
</compile_context>

<pallas_src>
import functools

import jax
import jax.numpy as jnp
from jax.experimental import pallas as pl
from jax.experimental.pallas import tpu as pltpu


def _round_up(x, m):
    return ((x + m - 1) // m) * m


# ---------------------------------------------------------------------------
# In-kernel causal dilated conv (channels-last) as MXU matmul(s)
# ---------------------------------------------------------------------------
def _causal_dilated_conv(act, pad_ref, w_ref, b_ref, *, dilation, ksize, t_len, bt):
    """act: (bt, t_len, C) f32 value.  Returns (bt*t_len, Cout) f32 pre-activation.

    pad_ref : (bt, >= pad+t_len, C) f32 VMEM scratch; causal left zero-pad is built
              here instead of concatenating a zeros tensor.
    w_ref   : (ksize*C, Cout) stacked-tap weight (tap k occupies rows [k*C, (k+1)*C)).
    b_ref   : (1, Cout).
    """
    c = act.shape[-1]
    pad = (ksize - 1) * dilation
    if pad > 0:
        # Scratch persists across grid steps and is NOT guaranteed zeroed; with a
        # megacore "parallel" split the second core never runs step 0, so this
        # cannot be gated on pl.program_id(0) == 0.  The pad rows are tiny.
        pad_ref[:, 0:pad, :] = jnp.zeros((bt, pad, c), jnp.float32)
    pad_ref[:, pad:pad + t_len, :] = act

    if ksize * c <= 256:
        # Stack the K dilated taps along the contraction axis -> ONE matmul with
        # contraction depth K*C (fills the 256-deep v6e/v7x MXU).  Taps are gathered
        # per batch element BEFORE the row concat so they never cross batch bounds.
        rows = []
        for b in range(bt):
            taps = [pad_ref[b, k * dilation: k * dilation + t_len, :]
                    for k in range(ksize)]
            rows.append(taps[0] if ksize == 1 else jnp.concatenate(taps, axis=-1))
        stk = rows[0] if bt == 1 else jnp.concatenate(rows, axis=0)   # (bt*T, K*C)
        out = jnp.dot(stk, w_ref[...], preferred_element_type=jnp.float32)
    else:
        # Deep-channel path (also the preferred form on v5e's 128-deep MXU):
        # K accumulated matmuls straight off the padded scratch slices.
        out = None
        for k in range(ksize):
            xs = [pad_ref[b, k * dilation: k * dilation + t_len, :] for b in range(bt)]
            xk = xs[0] if bt == 1 else jnp.concatenate(xs, axis=0)    # (bt*T, C)
            part = jnp.dot(xk, w_ref[k * c:(k + 1) * c, :],
                           preferred_element_type=jnp.float32)
            out = part if out is None else out + part
    return out + b_ref[...]


# ---------------------------------------------------------------------------
# Whole-network fused kernel: all TemporalBlocks + linear head
# ---------------------------------------------------------------------------
def _tcn_kernel(*refs, metas, ksize, t_len, bt):
    """refs = (x, [w1,b1,w2,b2(,wds,bds)] per block, wl, bl, out, pad scratches...)."""
    idx = 0
    x_ref = refs[idx]; idx += 1
    blk_refs = []
    for m in metas:
        w1, b1, w2, b2 = refs[idx:idx + 4]; idx += 4
        if m["has_ds"]:
            wds, bds = refs[idx:idx + 2]; idx += 2
        else:
            wds, bds = None, None
        blk_refs.append((w1, b1, w2, b2, wds, bds))
    wl_ref, bl_ref = refs[idx:idx + 2]; idx += 2
    out_ref = refs[idx]; idx += 1
    scratches = refs[idx:]                                  # 2 per block

    act = x_ref[...].astype(jnp.float32)                    # (bt, T, Cin_p)

    for bi, m in enumerate(metas):
        w1, b1, w2, b2, wds, bds = blk_refs[bi]
        d = m["dilation"]
        cout = b2.shape[-1]

        # conv1 -> relu (dropout = identity in eval mode)
        h = jnp.maximum(
            _causal_dilated_conv(act, scratches[2 * bi], w1, b1,
                                 dilation=d, ksize=ksize, t_len=t_len, bt=bt), 0.0)
        # conv2 -> relu  (relu2 of the reference TemporalBlock -- the previous bug)
        out = jnp.maximum(
            _causal_dilated_conv(h.reshape(bt, t_len, -1), scratches[2 * bi + 1], w2, b2,
                                 dilation=d, ksize=ksize, t_len=t_len, bt=bt), 0.0)
        # residual (x tile already resident in VMEM), optional 1x1 downsample
        xf = act.reshape(bt * t_len, -1)
        if wds is not None:
            res = jnp.dot(xf, wds[...], preferred_element_type=jnp.float32) + bds[...]
        else:
            res = xf
        act = jnp.maximum(out + res, 0.0).reshape(bt, t_len, cout)

    # Fused TCN head: relu(tcn(x))[:, :, -1] @ Wl + bl.  act is already post-ReLU so
    # the extra torch.relu is idempotent.  One (bt, C) matmul covers the whole tile;
    # the full last-block activation never touches HBM.
    y_last = act[:, t_len - 1, :]                            # (bt, Clast_p)
    out_ref[0] = (jnp.dot(y_last, wl_ref[...], preferred_element_type=jnp.float32)
                  + bl_ref[...]).astype(out_ref.dtype)


# ---------------------------------------------------------------------------
# Wrapper
# ---------------------------------------------------------------------------
def _choose_batch_tile(B, T):
    """Fill the MXU M dimension (~256 rows) per grid step, but keep >= 2 grid steps
    when B >= 2 so both v7x TensorCores get work under "parallel"."""
    bt = max(1, min(B, 256 // max(T, 1)))
    if B >= 2:
        bt = max(1, min(bt, B // 2))
    while B % bt:
        bt -= 1
    return bt


def tcn_forward(x_ncw, params, *, batch_tile=None):
    """x_ncw: (B, input_size, T) matching PyTorch NCW.  Returns (B, output_size)."""
    B, cin, T = x_ncw.shape
    x = jnp.transpose(x_ncw, (0, 2, 1))                      # -> (B, T, C) channels-last
    cin_p = _round_up(cin, 128)
    if cin_p != cin:
        x = jnp.pad(x, ((0, 0), (0, 0), (0, cin_p - cin)))   # pad channels once, up front

    ksize = params["kernel_size"]
    blocks = params["blocks"]
    bt = batch_tile if batch_tile is not None else _choose_batch_tile(B, T)
    assert B % bt == 0
    grid = (B // bt,)

    # Flat argument list + static per-block metadata.
    args = [x]
    metas = []
    for i, blk in enumerate(blocks):
        d = 2 ** i
        has_ds = blk["w_ds"] is not None
        args += [blk["w1"], blk["b1"], blk["w2"], blk["b2"]]
        if has_ds:
            args += [blk["w_ds"], blk["b_ds"]]
        metas.append(dict(dilation=d, has_ds=has_ds,
                          cin_p=blk["w1"].shape[0] // ksize,
                          cmid_p=blk["b1"].shape[-1],
                          cout_p=blk["b2"].shape[-1]))
    args += [params["lin_w"], params["lin_b"]]
    o_p = params["lin_b"].shape[-1]

    # BlockSpecs: x is batch-tiled; weights/biases are grid-constant -> single buffer.
    in_specs = [pl.BlockSpec((bt, T, cin_p), lambda g: (g, 0, 0))]
    for a in args[1:]:
        in_specs.append(pl.BlockSpec(a.shape, lambda g, n=a.ndim: (0,) * n,
                                     pipeline_mode=pl.Buffered(1)))
    out_shape = jax.ShapeDtypeStruct((grid[0], bt, o_p), x.dtype)
    out_specs = pl.BlockSpec((1, bt, o_p), lambda g: (g, 0, 0))

    # Two padded-activation scratches per block (rows rounded to a multiple of 8).
    scratch_shapes, scratch_bytes = [], 0
    for m in metas:
        rows = _round_up((ksize - 1) * m["dilation"] + T, 8)
        scratch_shapes.append(pltpu.VMEM((bt, rows, m["cin_p"]), jnp.float32))
        scratch_shapes.append(pltpu.VMEM((bt, rows, m["cmid_p"]), jnp.float32))
        scratch_bytes += bt * rows * (m["cin_p"] + m["cmid_p"]) * 4

    # VMEM budget derived from the actual allocation, capped v7x-safe (64 MiB/TC).
    weight_bytes = sum(int(a.size) * 4 for a in args[1:])            # single-buffered
    tile_bytes = (2 * bt * T * cin_p + 2 * bt * o_p) * 4             # double-buffered I/O
    cmax = max([cin_p] + [m["cmid_p"] for m in metas] + [m["cout_p"] for m in metas])
    work_bytes = 8 * bt * T * cmax * 4                               # rough live-temp bound
    need = weight_bytes + scratch_bytes + tile_bytes + work_bytes + (8 << 20)
    vmem_limit = int(min(max(need, 16 << 20), 48 << 20))

    flops = 0
    for m in metas:
        flops += 2 * B * T * ksize * m["cin_p"] * m["cmid_p"]
        flops += 2 * B * T * ksize * m["cmid_p"] * m["cout_p"]
        if m["has_ds"]:
            flops += 2 * B * T * m["cin_p"] * m["cout_p"]
    flops += 2 * B * metas[-1]["cout_p"] * o_p
    bytes_accessed = 4 * (int(x.size) + sum(int(a.size) for a in args[1:]) + B * o_p)
    cost = pl.CostEstimate(flops=int(flops), transcendentals=0,
                           bytes_accessed=int(bytes_accessed))

    kern = functools.partial(_tcn_kernel, metas=metas, ksize=ksize, t_len=T, bt=bt)
    out = pl.pallas_call(
        kern,
        out_shape=out_shape,
        grid=grid,
        in_specs=in_specs,
        out_specs=out_specs,
        scratch_shapes=scratch_shapes,
        compiler_params=pltpu.CompilerParams(
            dimension_semantics=("parallel",),
            vmem_limit_bytes=vmem_limit,
        ),
        cost_estimate=cost,
    )(*args)

    return out.reshape(B, o_p)[:, :params["output_size"]]


# ---------------------------------------------------------------------------
# Parameter construction (logical), padding/packing (device layout), reference
# ---------------------------------------------------------------------------
def make_raw_params(key, input_size, output_size, num_channels, kernel_size):
    params = {"blocks": []}
    for i, cout in enumerate(num_channels):
        cin = input_size if i == 0 else num_channels[i - 1]
        key, k1, k2, k3 = jax.random.split(key, 4)
        blk = {
            "w1": 0.2 * jax.random.normal(k1, (kernel_size, cin, cout), jnp.float32),
            "b1": jnp.zeros((cout,), jnp.float32) + 0.01,
            "w2": 0.2 * jax.random.normal(k2, (kernel_size, cout, cout), jnp.float32),
            "b2": jnp.zeros((cout,), jnp.float32) + 0.01,
        }
        if cin != cout:
            blk["w_ds"] = 0.2 * jax.random.normal(k3, (1, cin, cout), jnp.float32)
            blk["b_ds"] = jnp.zeros((cout,), jnp.float32)
        else:
            blk["w_ds"] = None
            blk["b_ds"] = None
        params["blocks"].append(blk)
    key, kl = jax.random.split(key)
    params["lin_w"] = 0.2 * jax.random.normal(kl, (num_channels[-1], output_size), jnp.float32)
    params["lin_b"] = jnp.full((output_size,), 0.01, jnp.float32)   # m.bias.data.fill_(0.01)
    return params


def pack_params(raw, output_size, kernel_size):
    """Pad channels to multiples of 128 and stack conv taps into (K*Cin_p, Cout_p) mats."""
    packed = {"blocks": [], "kernel_size": kernel_size, "output_size": output_size}
    for blk in raw["blocks"]:
        K, cin, cmid = blk["w1"].shape
        cout = blk["w2"].shape[2]
        cin_p, cmid_p, cout_p = (_round_up(c, 128) for c in (cin, cmid, cout))

        w1 = jnp.zeros((K, cin_p, cmid_p), jnp.float32).at[:, :cin, :cmid].set(blk["w1"])
        w2 = jnp.zeros((K, cmid_p, cout_p), jnp.float32).at[:, :cmid, :cout].set(blk["w2"])
        pb = {
            "w1": w1.reshape(K * cin_p, cmid_p),
            "b1": jnp.zeros((1, cmid_p), jnp.float32).at[0, :cmid].set(blk["b1"]),
            "w2": w2.reshape(K * cmid_p, cout_p),
            "b2": jnp.zeros((1, cout_p), jnp.float32).at[0, :cout].set(blk["b2"]),
        }
        if blk["w_ds"] is not None:
            pb["w_ds"] = (jnp.zeros((cin_p, cout_p), jnp.float32)
                          .at[:cin, :cout].set(blk["w_ds"][0]))
            pb["b_ds"] = jnp.zeros((1, cout_p), jnp.float32).at[0, :cout].set(blk["b_ds"])
        else:
            pb["w_ds"] = None
            pb["b_ds"] = None
        packed["blocks"].append(pb)

    clast = raw["lin_w"].shape[0]
    clast_p = _round_up(clast, 128)
    o_p = _round_up(output_size, 128)
    packed["lin_w"] = (jnp.zeros((clast_p, o_p), jnp.float32)
                       .at[:clast, :output_size].set(raw["lin_w"]))
    packed["lin_b"] = (jnp.zeros((1, o_p), jnp.float32)
                       .at[0, :output_size].set(raw["lin_b"]))
    return packed


def _ref_conv(x, w, b, dilation, pre_relu, res=None, post_relu=False):
    K = w.shape[0]
    pad = (K - 1) * dilation
    xpad = jnp.pad(x, ((0, 0), (pad, 0), (0, 0)))
    T = x.shape[1]
    out = sum(jnp.einsum("btc,cd->btd", xpad[:, k * dilation: k * dilation + T, :], w[k])
              for k in range(K)) + b
    if pre_relu:
        out = jnp.maximum(out, 0.0)
    if res is not None:
        out = out + res
    if post_relu:
        out = jnp.maximum(out, 0.0)
    return out


def ref_forward(x_ncw, raw):
    x = jnp.transpose(x_ncw, (0, 2, 1))
    for i, blk in enumerate(raw["blocks"]):
        d = 2 ** i
        h = _ref_conv(x, blk["w1"], blk["b1"], d, True)
        res = x if blk["w_ds"] is None else _ref_conv(x, blk["w_ds"], blk["b_ds"], 1, False)
        x = _ref_conv(h, blk["w2"], blk["b2"], d, True, res=res, post_relu=True)
    y1 = jnp.maximum(x, 0.0)
    return y1[:, -1, :] @ raw["lin_w"] + raw["lin_b"]


if __name__ == "__main__":
    B, input_size, T = 2, 4, 16
    num_channels = [8, 16]
    kernel_size = 2
    output_size = 3

    key = jax.random.PRNGKey(0)
    kx, kp = jax.random.split(key)
    x = jax.random.normal(kx, (B, input_size, T), jnp.float32)   # NCW, like PyTorch
    raw = make_raw_params(kp, input_size, output_size, num_channels, kernel_size)
    params = pack_params(raw, output_size, kernel_size)

    out = tcn_forward(x, params)
    out = jax.block_until_ready(out)

    with jax.default_matmul_precision("highest"):
        ref = ref_forward(x, raw)

    assert out.shape == (B, output_size), out.shape
    assert jnp.allclose(out, ref, rtol=2e-3, atol=2e-3), (out, ref)

    print("KERNEL_OK")
</pallas_src>

<mosaic_0001>
module attributes {stable_mosaic.version = 11 : i64} {
  func.func @_tcn_kernel(%arg0: i32, %arg1: memref<1x16x128xf32, #tpu.memory_space<vmem>>, %arg2: memref<256x128xf32, #tpu.memory_space<vmem>>, %arg3: memref<1x128xf32, #tpu.memory_space<vmem>>, %arg4: memref<256x128xf32, #tpu.memory_space<vmem>>, %arg5: memref<1x128xf32, #tpu.memory_space<vmem>>, %arg6: memref<128x128xf32, #tpu.memory_space<vmem>>, %arg7: memref<1x128xf32, #tpu.memory_space<vmem>>, %arg8: memref<256x128xf32, #tpu.memory_space<vmem>>, %arg9: memref<1x128xf32, #tpu.memory_space<vmem>>, %arg10: memref<256x128xf32, #tpu.memory_space<vmem>>, %arg11: memref<1x128xf32, #tpu.memory_space<vmem>>, %arg12: memref<128x128xf32, #tpu.memory_space<vmem>>, %arg13: memref<1x128xf32, #tpu.memory_space<vmem>>, %arg14: memref<128x128xf32, #tpu.memory_space<vmem>>, %arg15: memref<1x128xf32, #tpu.memory_space<vmem>>, %arg16: memref<1x1x128xf32, #tpu.memory_space<vmem>>, %arg17: memref<1x24x128xf32, #tpu.memory_space<vmem>>, %arg18: memref<1x24x128xf32, #tpu.memory_space<vmem>>, %arg19: memref<1x24x128xf32, #tpu.memory_space<vmem>>, %arg20: memref<1x24x128xf32, #tpu.memory_space<vmem>>) attributes {dimension_semantics = [#tpu.dimension_semantics<parallel>], iteration_bounds = array<i64: 2>, scalar_prefetch = 0 : i64, scratch_operands = 4 : i64, tpu.core_type = #tpu.core_type<tc>, window_params = [{transform_indices = @transform_0, window_bounds = array<i64: 1, 16, 128>}, {pipeline_mode = #tpu.pipeline_mode<synchronous>, transform_indices = @transform_1, window_bounds = array<i64: 256, 128>}, {pipeline_mode = #tpu.pipeline_mode<synchronous>, transform_indices = @transform_2, window_bounds = array<i64: 1, 128>}, {pipeline_mode = #tpu.pipeline_mode<synchronous>, transform_indices = @transform_3, window_bounds = array<i64: 256, 128>}, {pipeline_mode = #tpu.pipeline_mode<synchronous>, transform_indices = @transform_4, window_bounds = array<i64: 1, 128>}, {pipeline_mode = #tpu.pipeline_mode<synchronous>, transform_indices = @transform_5, window_bounds = array<i64: 128, 128>}, {pipeline_mode = #tpu.pipeline_mode<synchronous>, transform_indices = @transform_6, window_bounds = array<i64: 1, 128>}, {pipeline_mode = #tpu.pipeline_mode<synchronous>, transform_indices = @transform_7, window_bounds = array<i64: 256, 128>}, {pipeline_mode = #tpu.pipeline_mode<synchronous>, transform_indices = @transform_8, window_bounds = array<i64: 1, 128>}, {pipeline_mode = #tpu.pipeline_mode<synchronous>, transform_indices = @transform_9, window_bounds = array<i64: 256, 128>}, {pipeline_mode = #tpu.pipeline_mode<synchronous>, transform_indices = @transform_10, window_bounds = array<i64: 1, 128>}, {pipeline_mode = #tpu.pipeline_mode<synchronous>, transform_indices = @transform_11, window_bounds = array<i64: 128, 128>}, {pipeline_mode = #tpu.pipeline_mode<synchronous>, transform_indices = @transform_12, window_bounds = array<i64: 1, 128>}, {pipeline_mode = #tpu.pipeline_mode<synchronous>, transform_indices = @transform_13, window_bounds = array<i64: 128, 128>}, {pipeline_mode = #tpu.pipeline_mode<synchronous>, transform_indices = @transform_14, window_bounds = array<i64: 1, 128>}, {transform_indices = @transform_15, window_bounds = array<i64: 1, 1, 128>}]} {
    %c0 = arith.constant 0 : index
    %c0_0 = arith.constant 0 : index
    %c0_1 = arith.constant 0 : index
    %0 = vector.load %arg1[%c0, %c0_0, %c0_1] : memref<1x16x128xf32, #tpu.memory_space<vmem>>, vector<1x16x128xf32>
    %cst = arith.constant 0.000000e+00 : f32
    %1 = vector.broadcast %cst : f32 to vector<1x1x128xf32>
    %c0_2 = arith.constant 0 : index
    %c0_3 = arith.constant 0 : index
    %c0_4 = arith.constant 0 : index
    %2 = vector.load %arg17[%c0_2, %c0_3, %c0_4] : memref<1x24x128xf32, #tpu.memory_space<vmem>>, vector<1x1x128xf32>
    tpu.vector_store %arg17[%c0_2, %c0_3, %c0_4], %1 {strides = array<i32>} : memref<1x24x128xf32, #tpu.memory_space<vmem>>, vector<1x1x128xf32>,
    %c0_5 = arith.constant 0 : index
    %c1 = arith.constant 1 : index
    %c0_6 = arith.constant 0 : index
    %3 = vector.load %arg17[%c0_5, %c1, %c0_6] : memref<1x24x128xf32, #tpu.memory_space<vmem>>, vector<1x16x128xf32>
    tpu.vector_store %arg17[%c0_5, %c1, %c0_6], %0 {strides = array<i32>} : memref<1x24x128xf32, #tpu.memory_space<vmem>>, vector<1x16x128xf32>,
    %c0_7 = arith.constant 0 : index
    %c0_8 = arith.constant 0 : index
    %c0_9 = arith.constant 0 : index
    %4 = vector.load %arg17[%c0_7, %c0_8, %c0_9] : memref<1x24x128xf32, #tpu.memory_space<vmem>>, vector<1x16x128xf32>
    %5 = vector.shape_cast %4 : vector<1x16x128xf32> to vector<16x128xf32>
    %c0_10 = arith.constant 0 : index
    %c1_11 = arith.constant 1 : index
    %c0_12 = arith.constant 0 : index
    %6 = vector.load %arg17[%c0_10, %c1_11, %c0_12] : memref<1x24x128xf32, #tpu.memory_space<vmem>>, vector<1x16x128xf32>
    %7 = vector.shape_cast %6 : vector<1x16x128xf32> to vector<16x128xf32>
    %8 = tpu.concatenate %5, %7 in 1 : vector<16x128xf32>, vector<16x128xf32> -> vector<16x256xf32>
    %c0_13 = arith.constant 0 : index
    %c0_14 = arith.constant 0 : index
    %9 = vector.load %arg2[%c0_13, %c0_14] : memref<256x128xf32, #tpu.memory_space<vmem>>, vector<256x128xf32>
    %cst_15 = arith.constant dense<0.000000e+00> : vector<16x128xf32>
    %10 = tpu.matmul %8, %9, %cst_15 {dimension_numbers = #tpu.dot_dimension_numbers<[1], [0], [0], [1], [0, 0, 1, 1], [], []>} : vector<16x256xf32>, vector<256x128xf32>, vector<16x128xf32> -> vector<16x128xf32>
    %c0_16 = arith.constant 0 : index
    %c0_17 = arith.constant 0 : index
    %11 = vector.load %arg3[%c0_16, %c0_17] : memref<1x128xf32, #tpu.memory_space<vmem>>, vector<1x128xf32>
    %12 = vector.broadcast %11 : vector<1x128xf32> to vector<16x128xf32>
    %13 = arith.addf %10, %12 : vector<16x128xf32>
    %cst_18 = arith.constant 0.000000e+00 : f32
    %14 = vector.broadcast %cst_18 : f32 to vector<16x128xf32>
    %15 = arith.maximumf %13, %14 : vector<16x128xf32>
    %16 = vector.shape_cast %15 : vector<16x128xf32> to vector<1x16x128xf32>
    %cst_19 = arith.constant 0.000000e+00 : f32
    %17 = vector.broadcast %cst_19 : f32 to vector<1x1x128xf32>
    %c0_20 = arith.constant 0 : index
    %c0_21 = arith.constant 0 : index
    %c0_22 = arith.constant 0 : index
    %18 = vector.load %arg18[%c0_20, %c0_21, %c0_22] : memref<1x24x128xf32, #tpu.memory_space<vmem>>, vector<1x1x128xf32>
    tpu.vector_store %arg18[%c0_20, %c0_21, %c0_22], %17 {strides = array<i32>} : memref<1x24x128xf32, #tpu.memory_space<vmem>>, vector<1x1x128xf32>,
    %c0_23 = arith.constant 0 : index
    %c1_24 = arith.constant 1 : index
    %c0_25 = arith.constant 0 : index
    %19 = vector.load %arg18[%c0_23, %c1_24, %c0_25] : memref<1x24x128xf32, #tpu.memory_space<vmem>>, vector<1x16x128xf32>
    tpu.vector_store %arg18[%c0_23, %c1_24, %c0_25], %16 {strides = array<i32>} : memref<1x24x128xf32, #tpu.memory_space<vmem>>, vector<1x16x128xf32>,
    %c0_26 = arith.constant 0 : index
    %c0_27 = arith.constant 0 : index
    %c0_28 = arith.constant 0 : index
    %20 = vector.load %arg18[%c0_26, %c0_27, %c0_28] : memref<1x24x128xf32, #tpu.memory_space<vmem>>, vector<1x16x128xf32>
    %21 = vector.shape_cast %20 : vector<1x16x128xf32> to vector<16x128xf32>
    %c0_29 = arith.constant 0 : index
    %c1_30 = arith.constant 1 : index
    %c0_31 = arith.constant 0 : index
    %22 = vector.load %arg18[%c0_29, %c1_30, %c0_31] : memref<1x24x128xf32, #tpu.memory_space<vmem>>, vector<1x16x128xf32>
    %23 = vector.shape_cast %22 : vector<1x16x128xf32> to vector<16x128xf32>
    %24 = tpu.concatenate %21, %23 in 1 : vector<16x128xf32>, vector<16x128xf32> -> vector<16x256xf32>
    %c0_32 = arith.constant 0 : index
    %c0_33 = arith.constant 0 : index
    %25 = vector.load %arg4[%c0_32, %c0_33] : memref<256x128xf32, #tpu.memory_space<vmem>>, vector<256x128xf32>
    %cst_34 = arith.constant dense<0.000000e+00> : vector<16x128xf32>
    %26 = tpu.matmul %24, %25, %cst_34 {dimension_numbers = #tpu.dot_dimension_numbers<[1], [0], [0], [1], [0, 0, 1, 1], [], []>} : vector<16x256xf32>, vector<256x128xf32>, vector<16x128xf32> -> vector<16x128xf32>
    %c0_35 = arith.constant 0 : index
    %c0_36 = arith.constant 0 : index
    %27 = vector.load %arg5[%c0_35, %c0_36] : memref<1x128xf32, #tpu.memory_space<vmem>>, vector<1x128xf32>
    %28 = vector.broadcast %27 : vector<1x128xf32> to vector<16x128xf32>
    %29 = arith.addf %26, %28 : vector<16x128xf32>
    %cst_37 = arith.constant 0.000000e+00 : f32
    %30 = vector.broadcast %cst_37 : f32 to vector<16x128xf32>
    %31 = arith.maximumf %29, %30 : vector<16x128xf32>
    %32 = vector.shape_cast %0 : vector<1x16x128xf32> to vector<16x128xf32>
    %c0_38 = arith.constant 0 : index
    %c0_39 = arith.constant 0 : index
    %33 = vector.load %arg6[%c0_38, %c0_39] : memref<128x128xf32, #tpu.memory_space<vmem>>, vector<128x128xf32>
    %cst_40 = arith.constant dense<0.000000e+00> : vector<16x128xf32>
    %34 = tpu.matmul %32, %33, %cst_40 {dimension_numbers = #tpu.dot_dimension_numbers<[1], [0], [0], [1], [0, 0, 1, 1], [], []>} : vector<16x128xf32>, vector<128x128xf32>, vector<16x128xf32> -> vector<16x128xf32>
    %c0_41 = arith.constant 0 : index
    %c0_42 = arith.constant 0 : index
    %35 = vector.load %arg7[%c0_41, %c0_42] : memref<1x128xf32, #tpu.memory_space<vmem>>, vector<1x128xf32>
    %36 = vector.broadcast %35 : vector<1x128xf32> to vector<16x128xf32>
    %37 = arith.addf %34, %36 : vector<16x128xf32>
    %38 = arith.addf %31, %37 : vector<16x128xf32>
    %cst_43 = arith.constant 0.000000e+00 : f32
    %39 = vector.broadcast %cst_43 : f32 to vector<16x128xf32>
    %40 = arith.maximumf %38, %39 : vector<16x128xf32>
    %41 = vector.shape_cast %40 : vector<16x128xf32> to vector<1x16x128xf32>
    %cst_44 = arith.constant 0.000000e+00 : f32
    %42 = vector.broadcast %cst_44 : f32 to vector<1x2x128xf32>
    %c0_45 = arith.constant 0 : index
    %c0_46 = arith.constant 0 : index
    %c0_47 = arith.constant 0 : index
    %43 = vector.load %arg19[%c0_45, %c0_46, %c0_47] : memref<1x24x128xf32, #tpu.memory_space<vmem>>, vector<1x2x128xf32>
    tpu.vector_store %arg19[%c0_45, %c0_46, %c0_47], %42 {strides = array<i32>} : memref<1x24x128xf32, #tpu.memory_space<vmem>>, vector<1x2x128xf32>,
    %c0_48 = arith.constant 0 : index
    %c2 = arith.constant 2 : index
    %c0_49 = arith.constant 0 : index
    %44 = vector.load %arg19[%c0_48, %c2, %c0_49] : memref<1x24x128xf32, #tpu.memory_space<vmem>>, vector<1x16x128xf32>
    tpu.vector_store %arg19[%c0_48, %c2, %c0_49], %41 {strides = array<i32>} : memref<1x24x128xf32, #tpu.memory_space<vmem>>, vector<1x16x128xf32>,
    %c0_50 = arith.constant 0 : index
    %c0_51 = arith.constant 0 : index
    %c0_52 = arith.constant 0 : index
    %45 = vector.load %arg19[%c0_50, %c0_51, %c0_52] : memref<1x24x128xf32, #tpu.memory_space<vmem>>, vector<1x16x128xf32>
    %46 = vector.shape_cast %45 : vector<1x16x128xf32> to vector<16x128xf32>
    %c0_53 = arith.constant 0 : index
    %c2_54 = arith.constant 2 : index
    %c0_55 = arith.constant 0 : index
    %47 = vector.load %arg19[%c0_53, %c2_54, %c0_55] : memref<1x24x128xf32, #tpu.memory_space<vmem>>, vector<1x16x128xf32>
    %48 = vector.shape_cast %47 : vector<1x16x128xf32> to vector<16x128xf32>
    %49 = tpu.concatenate %46, %48 in 1 : vector<16x128xf32>, vector<16x128xf32> -> vector<16x256xf32>
    %c0_56 = arith.constant 0 : index
    %c0_57 = arith.constant 0 : index
    %50 = vector.load %arg8[%c0_56, %c0_57] : memref<256x128xf32, #tpu.memory_space<vmem>>, vector<256x128xf32>
    %cst_58 = arith.constant dense<0.000000e+00> : vector<16x128xf32>
    %51 = tpu.matmul %49, %50, %cst_58 {dimension_numbers = #tpu.dot_dimension_numbers<[1], [0], [0], [1], [0, 0, 1, 1], [], []>} : vector<16x256xf32>, vector<256x128xf32>, vector<16x128xf32> -> vector<16x128xf32>
    %c0_59 = arith.constant 0 : index
    %c0_60 = arith.constant 0 : index
    %52 = vector.load %arg9[%c0_59, %c0_60] : memref<1x128xf32, #tpu.memory_space<vmem>>, vector<1x128xf32>
    %53 = vector.broadcast %52 : vector<1x128xf32> to vector<16x128xf32>
    %54 = arith.addf %51, %53 : vector<16x128xf32>
    %cst_61 = arith.constant 0.000000e+00 : f32
    %55 = vector.broadcast %cst_61 : f32 to vector<16x128xf32>
    %56 = arith.maximumf %54, %55 : vector<16x128xf32>
    %57 = vector.shape_cast %56 : vector<16x128xf32> to vector<1x16x128xf32>
    %cst_62 = arith.constant 0.000000e+00 : f32
    %58 = vector.broadcast %cst_62 : f32 to vector<1x2x128xf32>
    %c0_63 = arith.constant 0 : index
    %c0_64 = arith.constant 0 : index
    %c0_65 = arith.constant 0 : index
    %59 = vector.load %arg20[%c0_63, %c0_64, %c0_65] : memref<1x24x128xf32, #tpu.memory_space<vmem>>, vector<1x2x128xf32>
    tpu.vector_store %arg20[%c0_63, %c0_64, %c0_65], %58 {strides = array<i32>} : memref<1x24x128xf32, #tpu.memory_space<vmem>>, vector<1x2x128xf32>,
    %c0_66 = arith.constant 0 : index
    %c2_67 = arith.constant 2 : index
    %c0_68 = arith.constant 0 : index
    %60 = vector.load %arg20[%c0_66, %c2_67, %c0_68] : memref<1x24x128xf32, #tpu.memory_space<vmem>>, vector<1x16x128xf32>
    tpu.vector_store %arg20[%c0_66, %c2_67, %c0_68], %57 {strides = array<i32>} : memref<1x24x128xf32, #tpu.memory_space<vmem>>, vector<1x16x128xf32>,
    %c0_69 = arith.constant 0 : index
    %c0_70 = arith.constant 0 : index
    %c0_71 = arith.constant 0 : index
    %61 = vector.load %arg20[%c0_69, %c0_70, %c0_71] : memref<1x24x128xf32, #tpu.memory_space<vmem>>, vector<1x16x128xf32>
    %62 = vector.shape_cast %61 : vector<1x16x128xf32> to vector<16x128xf32>
    %c0_72 = arith.constant 0 : index
    %c2_73 = arith.constant 2 : index
    %c0_74 = arith.constant 0 : index
    %63 = vector.load %arg20[%c0_72, %c2_73, %c0_74] : memref<1x24x128xf32, #tpu.memory_space<vmem>>, vector<1x16x128xf32>
    %64 = vector.shape_cast %63 : vector<1x16x128xf32> to vector<16x128xf32>
    %65 = tpu.concatenate %62, %64 in 1 : vector<16x128xf32>, vector<16x128xf32> -> vector<16x256xf32>
    %c0_75 = arith.constant 0 : index
    %c0_76 = arith.constant 0 : index
    %66 = vector.load %arg10[%c0_75, %c0_76] : memref<256x128xf32, #tpu.memory_space<vmem>>, vector<256x128xf32>
    %cst_77 = arith.constant dense<0.000000e+00> : vector<16x128xf32>
    %67 = tpu.matmul %65, %66, %cst_77 {dimension_numbers = #tpu.dot_dimension_numbers<[1], [0], [0], [1], [0, 0, 1, 1], [], []>} : vector<16x256xf32>, vector<256x128xf32>, vector<16x128xf32> -> vector<16x128xf32>
    %c0_78 = arith.constant 0 : index
    %c0_79 = arith.constant 0 : index
    %68 = vector.load %arg11[%c0_78, %c0_79] : memref<1x128xf32, #tpu.memory_space<vmem>>, vector<1x128xf32>
    %69 = vector.broadcast %68 : vector<1x128xf32> to vector<16x128xf32>
    %70 = arith.addf %67, %69 : vector<16x128xf32>
    %cst_80 = arith.constant 0.000000e+00 : f32
    %71 = vector.broadcast %cst_80 : f32 to vector<16x128xf32>
    %72 = arith.maximumf %70, %71 : vector<16x128xf32>
    %73 = vector.shape_cast %41 : vector<1x16x128xf32> to vector<16x128xf32>
    %c0_81 = arith.constant 0 : index
    %c0_82 = arith.constant 0 : index
    %74 = vector.load %arg12[%c0_81, %c0_82] : memref<128x128xf32, #tpu.memory_space<vmem>>, vector<128x128xf32>
    %cst_83 = arith.constant dense<0.000000e+00> : vector<16x128xf32>
    %75 = tpu.matmul %73, %74, %cst_83 {dimension_numbers = #tpu.dot_dimension_numbers<[1], [0], [0], [1], [0, 0, 1, 1], [], []>} : vector<16x128xf32>, vector<128x128xf32>, vector<16x128xf32> -> vector<16x128xf32>
    %c0_84 = arith.constant 0 : index
    %c0_85 = arith.constant 0 : index
    %76 = vector.load %arg13[%c0_84, %c0_85] : memref<1x128xf32, #tpu.memory_space<vmem>>, vector<1x128xf32>
    %77 = vector.broadcast %76 : vector<1x128xf32> to vector<16x128xf32>
    %78 = arith.addf %75, %77 : vector<16x128xf32>
    %79 = arith.addf %72, %78 : vector<16x128xf32>
    %cst_86 = arith.constant 0.000000e+00 : f32
    %80 = vector.broadcast %cst_86 : f32 to vector<16x128xf32>
    %81 = arith.maximumf %79, %80 : vector<16x128xf32>
    %82 = vector.shape_cast %81 : vector<16x128xf32> to vector<1x16x128xf32>
    %83 = vector.extract_strided_slice %82 {offsets = [0, 15, 0], sizes = [1, 1, 128], strides = [1, 1, 1]} : vector<1x16x128xf32> to vector<1x1x128xf32>
    %84 = vector.shape_cast %83 : vector<1x1x128xf32> to vector<1x128xf32>
    %c0_87 = arith.constant 0 : index
    %c0_88 = arith.constant 0 : index
    %85 = vector.load %arg14[%c0_87, %c0_88] : memref<128x128xf32, #tpu.memory_space<vmem>>, vector<128x128xf32>
    %cst_89 = arith.constant dense<0.000000e+00> : vector<1x128xf32>
    %86 = tpu.matmul %84, %85, %cst_89 {dimension_numbers = #tpu.dot_dimension_numbers<[1], [0], [0], [1], [0, 0, 1, 1], [], []>} : vector<1x128xf32>, vector<128x128xf32>, vector<1x128xf32> -> vector<1x128xf32>
    %c0_90 = arith.constant 0 : index
    %c0_91 = arith.constant 0 : index
    %87 = vector.load %arg15[%c0_90, %c0_91] : memref<1x128xf32, #tpu.memory_space<vmem>>, vector<1x128xf32>
    %88 = arith.addf %86, %87 : vector<1x128xf32>
    %c0_92 = arith.constant 0 : index
    %c0_93 = arith.constant 0 : index
    %c0_94 = arith.constant 0 : index
    %89 = vector.load %arg16[%c0_92, %c0_93, %c0_94] : memref<1x1x128xf32, #tpu.memory_space<vmem>>, vector<1x1x128xf32>
    %90 = vector.shape_cast %89 : vector<1x1x128xf32> to vector<1x128xf32>
    %91 = vector.shape_cast %88 : vector<1x128xf32> to vector<1x1x128xf32>
    tpu.vector_store %arg16[%c0_92, %c0_93, %c0_94], %91 {strides = array<i32>} : memref<1x1x128xf32, #tpu.memory_space<vmem>>, vector<1x1x128xf32>,
    return
  }
  func.func @transform_0(%arg0: i32) -> (i32, i32, i32) {
    %c0_i32 = arith.constant 0 : i32
    %c0_i32_0 = arith.constant 0 : i32
    %c0_i32_1 = arith.constant 0 : i32
    return %arg0, %c0_i32, %c0_i32_0 : i32, i32, i32
  }
  func.func @transform_1(%arg0: i32) -> (i32, i32) {
    %c0_i32 = arith.constant 0 : i32
    %c0_i32_0 = arith.constant 0 : i32
    %c0_i32_1 = arith.constant 0 : i32
    return %c0_i32, %c0_i32_0 : i32, i32
  }
  func.func @transform_2(%arg0: i32) -> (i32, i32) {
    %c0_i32 = arith.constant 0 : i32
    %c0_i32_0 = arith.constant 0 : i32
    %c0_i32_1 = arith.constant 0 : i32
    return %c0_i32, %c0_i32_0 : i32, i32
  }
  func.func @transform_3(%arg0: i32) -> (i32, i32) {
    %c0_i32 = arith.constant 0 : i32
    %c0_i32_0 = arith.constant 0 : i32
    %c0_i32_1 = arith.constant 0 : i32
    return %c0_i32, %c0_i32_0 : i32, i32
  }
  func.func @transform_4(%arg0: i32) -> (i32, i32) {
    %c0_i32 = arith.constant 0 : i32
    %c0_i32_0 = arith.constant 0 : i32
    %c0_i32_1 = arith.constant 0 : i32
    return %c0_i32, %c0_i32_0 : i32, i32
  }
  func.func @transform_5(%arg0: i32) -> (i32, i32) {
    %c0_i32 = arith.constant 0 : i32
    %c0_i32_0 = arith.constant 0 : i32
    %c0_i32_1 = arith.constant 0 : i32
    return %c0_i32, %c0_i32_0 : i32, i32
  }
  func.func @transform_6(%arg0: i32) -> (i32, i32) {
    %c0_i32 = arith.constant 0 : i32
    %c0_i32_0 = arith.constant 0 : i32
    %c0_i32_1 = arith.constant 0 : i32
    return %c0_i32, %c0_i32_0 : i32, i32
  }
  func.func @transform_7(%arg0: i32) -> (i32, i32) {
    %c0_i32 = arith.constant 0 : i32
    %c0_i32_0 = arith.constant 0 : i32
    %c0_i32_1 = arith.constant 0 : i32
    return %c0_i32, %c0_i32_0 : i32, i32
  }
  func.func @transform_8(%arg0: i32) -> (i32, i32) {
    %c0_i32 = arith.constant 0 : i32
    %c0_i32_0 = arith.constant 0 : i32
    %c0_i32_1 = arith.constant 0 : i32
    return %c0_i32, %c0_i32_0 : i32, i32
  }
  func.func @transform_9(%arg0: i32) -> (i32, i32) {
    %c0_i32 = arith.constant 0 : i32
    %c0_i32_0 = arith.constant 0 : i32
    %c0_i32_1 = arith.constant 0 : i32
    return %c0_i32, %c0_i32_0 : i32, i32
  }
  func.func @transform_10(%arg0: i32) -> (i32, i32) {
    %c0_i32 = arith.constant 0 : i32
    %c0_i32_0 = arith.constant 0 : i32
    %c0_i32_1 = arith.constant 0 : i32
    return %c0_i32, %c0_i32_0 : i32, i32
  }
  func.func @transform_11(%arg0: i32) -> (i32, i32) {
    %c0_i32 = arith.constant 0 : i32
    %c0_i32_0 = arith.constant 0 : i32
    %c0_i32_1 = arith.constant 0 : i32
    return %c0_i32, %c0_i32_0 : i32, i32
  }
  func.func @transform_12(%arg0: i32) -> (i32, i32) {
    %c0_i32 = arith.constant 0 : i32
    %c0_i32_0 = arith.constant 0 : i32
    %c0_i32_1 = arith.constant 0 : i32
    return %c0_i32, %c0_i32_0 : i32, i32
  }
  func.func @transform_13(%arg0: i32) -> (i32, i32) {
    %c0_i32 = arith.constant 0 : i32
    %c0_i32_0 = arith.constant 0 : i32
    %c0_i32_1 = arith.constant 0 : i32
    return %c0_i32, %c0_i32_0 : i32, i32
  }
  func.func @transform_14(%arg0: i32) -> (i32, i32) {
    %c0_i32 = arith.constant 0 : i32
    %c0_i32_0 = arith.constant 0 : i32
    %c0_i32_1 = arith.constant 0 : i32
    return %c0_i32, %c0_i32_0 : i32, i32
  }
  func.func @transform_15(%arg0: i32) -> (i32, i32, i32) {
    %c0_i32 = arith.constant 0 : i32
    %c0_i32_0 = arith.constant 0 : i32
    %c0_i32_1 = arith.constant 0 : i32
    return %arg0, %c0_i32, %c0_i32_0 : i32, i32, i32
  }
}

</mosaic_0001>

<llo_original>
// kernel: tpu_custom_call.1
$region0: #{tpu_custom_call.1}
  #allocation0 [shape = 'u32[]', space=smem, size = 0x4, offset = 0x4, fixed_abs, tag = 'smem constant byte address 0x4 - core index']
  #allocation1 [shape = 'u32[72,128]{1,0:T(1,128)}', space=vmem, size = 0x9000, scoped, tag = 'internal scratch']
  #allocation2 [shape = 'f32[1,24,128]{2,1,0:T(8,128)}', space=vmem, size = 0x3000, scoped, tag = 'scratch operand']
  #allocation3 [shape = 'f32[1,24,128]{2,1,0:T(8,128)}', space=vmem, size = 0x3000, scoped, tag = 'scratch operand']
  #allocation4 [shape = 'f32[1,24,128]{2,1,0:T(8,128)}', space=vmem, size = 0x3000, scoped, tag = 'scratch operand']
  #allocation5 [shape = 'f32[1,24,128]{2,1,0:T(8,128)}', space=vmem, size = 0x3000, scoped, tag = 'scratch operand']
  %s0 = inlined_call_operand.hbm [shape: f32[2,16,128], index: 0, kind: input, shape index: {}]
  %s1 = inlined_call_operand.hbm [shape: f32[256,128], index: 1, kind: input, shape index: {}]
  %s2 = inlined_call_operand.vmem [shape: f32[1,128], index: 2, kind: input, shape index: {}]
  %s3 = inlined_call_operand.hbm [shape: f32[256,128], index: 3, kind: input, shape index: {}]
  %s4 = inlined_call_operand.vmem [shape: f32[1,128], index: 4, kind: input, shape index: {}]
  %s5 = inlined_call_operand.hbm [shape: f32[128,128], index: 5, kind: input, shape index: {}]
  %s6 = inlined_call_operand.vmem [shape: f32[1,128], index: 6, kind: input, shape index: {}]
  %s7 = inlined_call_operand.hbm [shape: f32[256,128], index: 7, kind: input, shape index: {}]
  %s8 = inlined_call_operand.vmem [shape: f32[1,128], index: 8, kind: input, shape index: {}]
  %s9 = inlined_call_operand.hbm [shape: f32[256,128], index: 9, kind: input, shape index: {}]
  %s10 = inlined_call_operand.vmem [shape: f32[1,128], index: 10, kind: input, shape index: {}]
  %s11 = inlined_call_operand.hbm [shape: f32[128,128], index: 11, kind: input, shape index: {}]
  %s12 = inlined_call_operand.vmem [shape: f32[1,128], index: 12, kind: input, shape index: {}]
  %s13 = inlined_call_operand.hbm [shape: f32[128,128], index: 13, kind: input, shape index: {}]
  %s14 = inlined_call_operand.vmem [shape: f32[1,128], index: 14, kind: input, shape index: {}]
  %s15 = inlined_call_operand.hbm [shape: f32[2,1,128], index: 15, kind: output, shape index: {}]
  %s16 = sld [smem:[#allocation0]]
  $region125: #{tpu_custom_call.1} parent=0
    _
  %s18 = ssub.s32 1, %s16
  %s19 = scalar_select 0, %s18, %s16
  $region1: #{tpu_custom_call.1} parent=0
    #allocation6 [shape = 'u8[16384]{0}', space=vmem, size = 0x4000, scoped, tag = 'input window, operand 0']
    #allocation7 [shape = 's32[2]{0}', space=sflag, size = 0x8, scoped, tag = 'scoped memory for tpu_custom_call.1']
    #allocation8 [shape = 's32[2]{0}', space=sflag, size = 0x8, scoped, tag = 'scoped memory for tpu_custom_call.1']
    #allocation9 [shape = 'u8[131072]{0}', space=vmem, size = 0x20000, scoped, tag = 'input window, operand 1, single buffered']
    #allocation10 [shape = 's32[1]{0}', space=sflag, size = 0x4, scoped, tag = 'scoped memory for tpu_custom_call.1']
    #allocation11 [shape = 'u8[131072]{0}', space=vmem, size = 0x20000, scoped, tag = 'input window, operand 3, single buffered']
    #allocation12 [shape = 'u8[65536]{0}', space=vmem, size = 0x10000, scoped, tag = 'input window, operand 5, single buffered']
    #allocation13 [shape = 's32[1]{0}', space=sflag, size = 0x4, scoped, tag = 'scoped memory for tpu_custom_call.1']
    #allocation14 [shape = 'u8[131072]{0}', space=vmem, size = 0x20000, scoped, tag = 'input window, operand 7, single buffered']
    #allocation15 [shape = 'u8[131072]{0}', space=vmem, size = 0x20000, scoped, tag = 'input window, operand 9, single buffered']
    #allocation16 [shape = 's32[1]{0}', space=sflag, size = 0x4, scoped, tag = 'scoped memory for tpu_custom_call.1']
    #allocation17 [shape = 'u8[65536]{0}', space=vmem, size = 0x10000, scoped, tag = 'input window, operand 11, single buffered']
    #allocation18 [shape = 'u8[65536]{0}', space=vmem, size = 0x10000, scoped, tag = 'input window, operand 13, single buffered']
    #allocation19 [shape = 's32[1]{0}', space=sflag, size = 0x4, scoped, tag = 'scoped memory for tpu_custom_call.1']
    #allocation20 [shape = 'u8[1024]{0}', space=vmem, size = 0x400, scoped, tag = 'output window, operand 0']
    %20 = vsyncpa [#allocation7], 0
    %s21 = scalar_lea.sflag [#allocation7], 1
    %22 = vsyncpa %s21, 0
    %23 = vsyncpa [#allocation10], 0
    %24 = vsyncpa [#allocation13], 0
    %25 = vsyncpa [#allocation16], 0
    %26 = vsyncpa [#allocation19], 0
    %27 = vsyncpa [#allocation8], 0
    %s28 = scalar_lea.sflag [#allocation8], 1
    %29 = vsyncpa %s28, 0
    loop: start=0, step=1, limit=4
    $region2: #{tpu_custom_call.1} parent=1 // loop_pre_header
      _
    $region3: #{tpu_custom_call.1} parent=1 // loop_header
      %s31 = sphi 0, %s35
      %p32 = scmp.ge.s32.totalorder %s31, 4
      %s41 = sphi 0, %s43
      %s44 = sphi 0, %s41
      %s45 = sphi 0, %s44
      %s61 = sphi 0, %s45
      %s65 = sphi 0, %s65
      %s67 = sphi 0, %s65
      %s68 = sphi 0, %s67
      %s82 = sphi 0, %s68
      %s86 = sphi 0, %s86
      %s88 = sphi 0, %s86
      %s89 = sphi 0, %s88
      %s103 = sphi 0, %s89
      %s107 = sphi 0, %s107
      %s109 = sphi 0, %s107
      %s110 = sphi 0, %s109
      %s124 = sphi 0, %s110
      %s128 = sphi 0, %s128
      %s130 = sphi 0, %s128
      %s131 = sphi 0, %s130
      %s145 = sphi 0, %s131
      %s149 = sphi 0, %s149
      %s151 = sphi 0, %s149
      %s152 = sphi 0, %s151
      %s166 = sphi 0, %s152
      %s170 = sphi 0, %s170
      %s172 = sphi 0, %s170
      %s173 = sphi 0, %s172
      %s187 = sphi 0, %s173
      %s191 = sphi 0, %s191
      %s193 = sphi 0, %s191
      %s194 = sphi 0, %s193
      %s208 = sphi 0, %s194
      %s212 = sphi 0, %s212
      %s214 = sphi 0, %s212
      %s215 = sphi 0, %s214
      %s229 = sphi 0, %s215
      %s233 = sphi 0, %s233
      %s235 = sphi 0, %s233
      %s236 = sphi 0, %s235
      %s250 = sphi 0, %s236
      %s254 = sphi 0, %s254
      %s256 = sphi 0, %s254
      %s257 = sphi 0, %s256
      %s271 = sphi 0, %s257
      %s275 = sphi 0, %s275
      %s277 = sphi 0, %s275
      %s278 = sphi 0, %s277
      %s292 = sphi 0, %s278
      %s296 = sphi 0, %s296
      %s298 = sphi 0, %s296
      %s299 = sphi 0, %s298
      %s313 = sphi 0, %s299
      %s317 = sphi 0, %s317
      %s319 = sphi 0, %s317
      %s320 = sphi 0, %s319
      %s334 = sphi 0, %s320
      %s338 = sphi 0, %s338
      %s340 = sphi 0, %s338
      %s341 = sphi 0, %s340
      %s355 = sphi 0, %s341
      %s361 = sphi 0, %s363
      %s364 = sphi 0, %s361
      %s365 = sphi 0, %s364
      %s381 = sphi 0, %s365
    $region4: #{tpu_custom_call.1} parent=1 // loop_header_branch
      %34 = sbr.rel (%p32) target = $region8
    $region5: #{tpu_custom_call.1} parent=1 // loop_body
      %s36 = ssub.s32 %s31, 1
      %s37 = ssub.s32 %s31, 2
      %s38 = sadd.s32 %s31, 1
      %s39 = ssub.s32 %s31, %s38
      %p40 = scmp.eq.s32.totalorder %s39, 0
      %s42 = sadd.s32 %s41, 1
      %s43 = scalar_select %p40, %s41, %s42
      %p46 = pneg %p40
      %p47 = scmp.eq.s32.totalorder %s31, 1
      %p48 = por %p46, %p47
      %p49 = scmp.ne.s32.totalorder %s41, %s44
      %p50 = scmp.eq.s32.totalorder %s31, 0
      %p51 = por %p49, %p50
      %p52 = scmp.ne.s32.totalorder %s41, %s44
      %p53 = scmp.eq.s32.totalorder %s36, 1
      %p54 = por %p52, %p53
      %p55 = scmp.ne.s32.totalorder %s44, %s45
      %p56 = scmp.eq.s32.totalorder %s36, 0
      %p57 = por %p55, %p56
      %p58 = scmp.ne.s32.totalorder %s44, %s45
      %p59 = scmp.eq.s32.totalorder %s37, 1
      %p60 = por %p58, %p59
      %p62 = scmp.ne.s32.totalorder %s45, %s61
      %p63 = scmp.eq.s32.totalorder %s37, 0
      %p64 = por %p62, %p63
      %s66 = sadd.s32 %s65, 1
      %p69 = scmp.eq.s32.totalorder %s31, 1
      %p70 = scmp.ne.s32.totalorder %s65, %s67
      %p71 = scmp.eq.s32.totalorder %s31, 0
      %p72 = por %p70, %p71
      %p73 = scmp.ne.s32.totalorder %s65, %s67
      %p74 = scmp.eq.s32.totalorder %s36, 1
      %p75 = por %p73, %p74
      %p76 = scmp.ne.s32.totalorder %s67, %s68
      %p77 = scmp.eq.s32.totalorder %s36, 0
      %p78 = por %p76, %p77
      %p79 = scmp.ne.s32.totalorder %s67, %s68
      %p80 = scmp.eq.s32.totalorder %s37, 1
      %p81 = por %p79, %p80
      %p83 = scmp.ne.s32.totalorder %s68, %s82
      %p84 = scmp.eq.s32.totalorder %s37, 0
      %p85 = por %p83, %p84
      %s87 = sadd.s32 %s86, 1
      %p90 = scmp.eq.s32.totalorder %s31, 1
      %p91 = scmp.ne.s32.totalorder %s86, %s88
      %p92 = scmp.eq.s32.totalorder %s31, 0
      %p93 = por %p91, %p92
      %p94 = scmp.ne.s32.totalorder %s86, %s88
      %p95 = scmp.eq.s32.totalorder %s36, 1
      %p96 = por %p94, %p95
      %p97 = scmp.ne.s32.totalorder %s88, %s89
      %p98 = scmp.eq.s32.totalorder %s36, 0
      %p99 = por %p97, %p98
      %p100 = scmp.ne.s32.totalorder %s88, %s89
      %p101 = scmp.eq.s32.totalorder %s37, 1
      %p102 = por %p100, %p101
      %p104 = scmp.ne.s32.totalorder %s89, %s103
      %p105 = scmp.eq.s32.totalorder %s37, 0
      %p106 = por %p104, %p105
      %s108 = sadd.s32 %s107, 1
      %p111 = scmp.eq.s32.totalorder %s31, 1
      %p112 = scmp.ne.s32.totalorder %s107, %s109
      %p113 = scmp.eq.s32.totalorder %s31, 0
      %p114 = por %p112, %p113
      %p115 = scmp.ne.s32.totalorder %s107, %s109
      %p116 = scmp.eq.s32.totalorder %s36, 1
      %p117 = por %p115, %p116
      %p118 = scmp.ne.s32.totalorder %s109, %s110
      %p119 = scmp.eq.s32.totalorder %s36, 0
      %p120 = por %p118, %p119
      %p121 = scmp.ne.s32.totalorder %s109, %s110
      %p122 = scmp.eq.s32.totalorder %s37, 1
      %p123 = por %p121, %p122
      %p125 = scmp.ne.s32.totalorder %s110, %s124
      %p126 = scmp.eq.s32.totalorder %s37, 0
      %p127 = por %p125, %p126
      %s129 = sadd.s32 %s128, 1
      %p132 = scmp.eq.s32.totalorder %s31, 1
      %p133 = scmp.ne.s32.totalorder %s128, %s130
      %p134 = scmp.eq.s32.totalorder %s31, 0
      %p135 = por %p133, %p134
      %p136 = scmp.ne.s32.totalorder %s128, %s130
      %p137 = scmp.eq.s32.totalorder %s36, 1
      %p138 = por %p136, %p137
      %p139 = scmp.ne.s32.totalorder %s130, %s131
      %p140 = scmp.eq.s32.totalorder %s36, 0
      %p141 = por %p139, %p140
      %p142 = scmp.ne.s32.totalorder %s130, %s131
      %p143 = scmp.eq.s32.totalorder %s37, 1
      %p144 = por %p142, %p143
      %p146 = scmp.ne.s32.totalorder %s131, %s145
      %p147 = scmp.eq.s32.totalorder %s37, 0
      %p148 = por %p146, %p147
      %s150 = sadd.s32 %s149, 1
      %p153 = scmp.eq.s32.totalorder %s31, 1
      %p154 = scmp.ne.s32.totalorder %s149, %s151
      %p155 = scmp.eq.s32.totalorder %s31, 0
      %p156 = por %p154, %p155
      %p157 = scmp.ne.s32.totalorder %s149, %s151
      %p158 = scmp.eq.s32.totalorder %s36, 1
      %p159 = por %p157, %p158
      %p160 = scmp.ne.s32.totalorder %s151, %s152
      %p161 = scmp.eq.s32.totalorder %s36, 0
      %p162 = por %p160, %p161
      %p163 = scmp.ne.s32.totalorder %s151, %s152
      %p164 = scmp.eq.s32.totalorder %s37, 1
      %p165 = por %p163, %p164
      %p167 = scmp.ne.s32.totalorder %s152, %s166
      %p168 = scmp.eq.s32.totalorder %s37, 0
      %p169 = por %p167, %p168
      %s171 = sadd.s32 %s170, 1
      %p174 = scmp.eq.s32.totalorder %s31, 1
      %p175 = scmp.ne.s32.totalorder %s170, %s172
      %p176 = scmp.eq.s32.totalorder %s31, 0
      %p177 = por %p175, %p176
      %p178 = scmp.ne.s32.totalorder %s170, %s172
      %p179 = scmp.eq.s32.totalorder %s36, 1
      %p180 = por %p178, %p179
      %p181 = scmp.ne.s32.totalorder %s172, %s173
      %p182 = scmp.eq.s32.totalorder %s36, 0
      %p183 = por %p181, %p182
      %p184 = scmp.ne.s32.totalorder %s172, %s173
      %p185 = scmp.eq.s32.totalorder %s37, 1
      %p186 = por %p184, %p185
      %p188 = scmp.ne.s32.totalorder %s173, %s187
      %p189 = scmp.eq.s32.totalorder %s37, 0
      %p190 = por %p188, %p189
      %s192 = sadd.s32 %s191, 1
      %p195 = scmp.eq.s32.totalorder %s31, 1
      %p196 = scmp.ne.s32.totalorder %s191, %s193
      %p197 = scmp.eq.s32.totalorder %s31, 0
      %p198 = por %p196, %p197
      %p199 = scmp.ne.s32.totalorder %s191, %s193
      %p200 = scmp.eq.s32.totalorder %s36, 1
      %p201 = por %p199, %p200
      %p202 = scmp.ne.s32.totalorder %s193, %s194
      %p203 = scmp.eq.s32.totalorder %s36, 0
      %p204 = por %p202, %p203
      %p205 = scmp.ne.s32.totalorder %s193, %s194
      %p206 = scmp.eq.s32.totalorder %s37, 1
      %p207 = por %p205, %p206
      %p209 = scmp.ne.s32.totalorder %s194, %s208
      %p210 = scmp.eq.s32.totalorder %s37, 0
      %p211 = por %p209, %p210
      %s213 = sadd.s32 %s212, 1
      %p216 = scmp.eq.s32.totalorder %s31, 1
      %p217 = scmp.ne.s32.totalorder %s212, %s214
      %p218 = scmp.eq.s32.totalorder %s31, 0
      %p219 = por %p217, %p218
      %p220 = scmp.ne.s32.totalorder %s212, %s214
      %p221 = scmp.eq.s32.totalorder %s36, 1
      %p222 = por %p220, %p221
      %p223 = scmp.ne.s32.totalorder %s214, %s215
      %p224 = scmp.eq.s32.totalorder %s36, 0
      %p225 = por %p223, %p224
      %p226 = scmp.ne.s32.totalorder %s214, %s215
      %p227 = scmp.eq.s32.totalorder %s37, 1
      %p228 = por %p226, %p227
      %p230 = scmp.ne.s32.totalorder %s215, %s229
      %p231 = scmp.eq.s32.totalorder %s37, 0
      %p232 = por %p230, %p231
      %s234 = sadd.s32 %s233, 1
      %p237 = scmp.eq.s32.totalorder %s31, 1
      %p238 = scmp.ne.s32.totalorder %s233, %s235
      %p239 = scmp.eq.s32.totalorder %s31, 0
      %p240 = por %p238, %p239
      %p241 = scmp.ne.s32.totalorder %s233, %s235
      %p242 = scmp.eq.s32.totalorder %s36, 1
      %p243 = por %p241, %p242
      %p244 = scmp.ne.s32.totalorder %s235, %s236
      %p245 = scmp.eq.s32.totalorder %s36, 0
      %p246 = por %p244, %p245
      %p247 = scmp.ne.s32.totalorder %s235, %s236
      %p248 = scmp.eq.s32.totalorder %s37, 1
      %p249 = por %p247, %p248
      %p251 = scmp.ne.s32.totalorder %s236, %s250
      %p252 = scmp.eq.s32.totalorder %s37, 0
      %p253 = por %p251, %p252
      %s255 = sadd.s32 %s254, 1
      %p258 = scmp.eq.s32.totalorder %s31, 1
      %p259 = scmp.ne.s32.totalorder %s254, %s256
      %p260 = scmp.eq.s32.totalorder %s31, 0
      %p261 = por %p259, %p260
      %p262 = scmp.ne.s32.totalorder %s254, %s256
      %p263 = scmp.eq.s32.totalorder %s36, 1
      %p264 = por %p262, %p263
      %p265 = scmp.ne.s32.totalorder %s256, %s257
      %p266 = scmp.eq.s32.totalorder %s36, 0
      %p267 = por %p265, %p266
      %p268 = scmp.ne.s32.totalorder %s256, %s257
      %p269 = scmp.eq.s32.totalorder %s37, 1
      %p270 = por %p268, %p269
      %p272 = scmp.ne.s32.totalorder %s257, %s271
      %p273 = scmp.eq.s32.totalorder %s37, 0
      %p274 = por %p272, %p273
      %s276 = sadd.s32 %s275, 1
      %p279 = scmp.eq.s32.totalorder %s31, 1
      %p280 = scmp.ne.s32.totalorder %s275, %s277
      %p281 = scmp.eq.s32.totalorder %s31, 0
      %p282 = por %p280, %p281
      %p283 = scmp.ne.s32.totalorder %s275, %s277
      %p284 = scmp.eq.s32.totalorder %s36, 1
      %p285 = por %p283, %p284
      %p286 = scmp.ne.s32.totalorder %s277, %s278
      %p287 = scmp.eq.s32.totalorder %s36, 0
      %p288 = por %p286, %p287
      %p289 = scmp.ne.s32.totalorder %s277, %s278
      %p290 = scmp.eq.s32.totalorder %s37, 1
      %p291 = por %p289, %p290
      %p293 = scmp.ne.s32.totalorder %s278, %s292
      %p294 = scmp.eq.s32.totalorder %s37, 0
      %p295 = por %p293, %p294
      %s297 = sadd.s32 %s296, 1
      %p300 = scmp.eq.s32.totalorder %s31, 1
      %p301 = scmp.ne.s32.totalorder %s296, %s298
      %p302 = scmp.eq.s32.totalorder %s31, 0
      %p303 = por %p301, %p302
      %p304 = scmp.ne.s32.totalorder %s296, %s298
      %p305 = scmp.eq.s32.totalorder %s36, 1
      %p306 = por %p304, %p305
      %p307 = scmp.ne.s32.totalorder %s298, %s299
      %p308 = scmp.eq.s32.totalorder %s36, 0
      %p309 = por %p307, %p308
      %p310 = scmp.ne.s32.totalorder %s298, %s299
      %p311 = scmp.eq.s32.totalorder %s37, 1
      %p312 = por %p310, %p311
      %p314 = scmp.ne.s32.totalorder %s299, %s313
      %p315 = scmp.eq.s32.totalorder %s37, 0
      %p316 = por %p314, %p315
      %s318 = sadd.s32 %s317, 1
      %p321 = scmp.eq.s32.totalorder %s31, 1
      %p322 = scmp.ne.s32.totalorder %s317, %s319
      %p323 = scmp.eq.s32.totalorder %s31, 0
      %p324 = por %p322, %p323
      %p325 = scmp.ne.s32.totalorder %s317, %s319
      %p326 = scmp.eq.s32.totalorder %s36, 1
      %p327 = por %p325, %p326
      %p328 = scmp.ne.s32.totalorder %s319, %s320
      %p329 = scmp.eq.s32.totalorder %s36, 0
      %p330 = por %p328, %p329
      %p331 = scmp.ne.s32.totalorder %s319, %s320
      %p332 = scmp.eq.s32.totalorder %s37, 1
      %p333 = por %p331, %p332
      %p335 = scmp.ne.s32.totalorder %s320, %s334
      %p336 = scmp.eq.s32.totalorder %s37, 0
      %p337 = por %p335, %p336
      %s339 = sadd.s32 %s338, 1
      %p342 = scmp.eq.s32.totalorder %s31, 1
      %p343 = scmp.ne.s32.totalorder %s338, %s340
      %p344 = scmp.eq.s32.totalorder %s31, 0
      %p345 = por %p343, %p344
      %p346 = scmp.ne.s32.totalorder %s338, %s340
      %p347 = scmp.eq.s32.totalorder %s36, 1
      %p348 = por %p346, %p347
      %p349 = scmp.ne.s32.totalorder %s340, %s341
      %p350 = scmp.eq.s32.totalorder %s36, 0
      %p351 = por %p349, %p350
      %p352 = scmp.ne.s32.totalorder %s340, %s341
      %p353 = scmp.eq.s32.totalorder %s37, 1
      %p354 = por %p352, %p353
      %p356 = scmp.ne.s32.totalorder %s341, %s355
      %p357 = scmp.eq.s32.totalorder %s37, 0
      %p358 = por %p356, %p357
      %s359 = ssub.s32 %s31, %s38
      %p360 = scmp.eq.s32.totalorder %s359, 0
      %s362 = sadd.s32 %s361, 1
      %s363 = scalar_select %p360, %s361, %s362
      %p366 = pneg %p360
      %p367 = scmp.eq.s32.totalorder %s31, 1
      %p368 = por %p366, %p367
      %p369 = scmp.ne.s32.totalorder %s361, %s364
      %p370 = scmp.eq.s32.totalorder %s31, 0
      %p371 = por %p369, %p370
      %p372 = scmp.ne.s32.totalorder %s361, %s364
      %p373 = scmp.eq.s32.totalorder %s36, 1
      %p374 = por %p372, %p373
      %p375 = scmp.ne.s32.totalorder %s364, %s365
      %p376 = scmp.eq.s32.totalorder %s36, 0
      %p377 = por %p375, %p376
      %p378 = scmp.ne.s32.totalorder %s364, %s365
      %p379 = scmp.eq.s32.totalorder %s37, 1
      %p380 = por %p378, %p379
      %p382 = scmp.ne.s32.totalorder %s365, %s381
      %p383 = scmp.eq.s32.totalorder %s37, 0
      %p384 = por %p382, %p383
      %p385 = scmp.le.s32.totalorder 1, %s31
      %p386 = scmp.lt.s32.totalorder %s31, 3
      %p387 = pnand %p385, %p386
      %p388 = pneg %p387
      // Predicated region
      $region9: #{tpu_custom_call.1} parent=5 // pred_check
        _
      $region10: #{tpu_custom_call.1} parent=5 // pred_check_branch
        %390 = sbr.rel (%p387) target = $region12
      $region11: #{tpu_custom_call.1} parent=5 // pred_region
        %s391 = ssub.s32 %s31, 1
        // Predicated region
        $region13: #{tpu_custom_call.1} parent=11 // pred_check
          %p392 = pneg %p78
        $region14: #{tpu_custom_call.1} parent=11 // pred_check_branch
          %394 = sbr.rel (%p392) target = $region16
        $region15: #{tpu_custom_call.1} parent=11 // pred_region
          %396 = vsyncadd [#allocation10], 0
          %s397 = sshll.u32 %s1, 4
          %s398 = int_to_ptr.hbm [resolvable:$true] %s397
          %s399 = sshll.u32 [#allocation9], 4
          %s400 = int_to_ptr.vmem [resolvable:$true] %s399
          %405 = dma.hbm_to_vmem [thread:$0]  %s398, 4096, %s400, [#allocation10], 128, 128, 8
        $region16: #{tpu_custom_call.1} parent=11 // pred_fallthru
          _
        // Predicated region
        $region17: #{tpu_custom_call.1} parent=11 // pred_check
          %p406 = pneg %p99
        $region18: #{tpu_custom_call.1} parent=11 // pred_check_branch
          %408 = sbr.rel (%p406) target = $region20
        $region19: #{tpu_custom_call.1} parent=11 // pred_region
          _
        $region20: #{tpu_custom_call.1} parent=11 // pred_fallthru
          _
        // Predicated region
        $region21: #{tpu_custom_call.1} parent=11 // pred_check
          %p409 = pneg %p120
        $region22: #{tpu_custom_call.1} parent=11 // pred_check_branch
          %411 = sbr.rel (%p409) target = $region24
        $region23: #{tpu_custom_call.1} parent=11 // pred_region
          %413 = vsyncadd [#allocation10], 0
          %s414 = sshll.u32 %s3, 4
          %s415 = int_to_ptr.hbm [resolvable:$true] %s414
          %s416 = sshll.u32 [#allocation11], 4
          %s417 = int_to_ptr.vmem [resolvable:$true] %s416
          %422 = dma.hbm_to_vmem [thread:$0]  %s415, 4096, %s417, [#allocation10], 128, 128, 8
        $region24: #{tpu_custom_call.1} parent=11 // pred_fallthru
          _
        // Predicated region
        $region25: #{tpu_custom_call.1} parent=11 // pred_check
          %p423 = pneg %p141
        $region26: #{tpu_custom_call.1} parent=11 // pred_check_branch
          %425 = sbr.rel (%p423) target = $region28
        $region27: #{tpu_custom_call.1} parent=11 // pred_region
          _
        $region28: #{tpu_custom_call.1} parent=11 // pred_fallthru
          _
        // Predicated region
        $region29: #{tpu_custom_call.1} parent=11 // pred_check
          %p426 = pneg %p162
        $region30: #{tpu_custom_call.1} parent=11 // pred_check_branch
          %428 = sbr.rel (%p426) target = $region32
        $region31: #{tpu_custom_call.1} parent=11 // pred_region
          %430 = vsyncadd [#allocation13], 0
          %s431 = sshll.u32 %s5, 4
          %s432 = int_to_ptr.hbm [resolvable:$true] %s431
          %s433 = sshll.u32 [#allocation12], 4
          %s434 = int_to_ptr.vmem [resolvable:$true] %s433
          %439 = dma.hbm_to_vmem [thread:$0]  %s432, 2048, %s434, [#allocation13], 128, 128, 8
        $region32: #{tpu_custom_call.1} parent=11 // pred_fallthru
          _
        // Predicated region
        $region33: #{tpu_custom_call.1} parent=11 // pred_check
          %p440 = pneg %p183
        $region34: #{tpu_custom_call.1} parent=11 // pred_check_branch
          %442 = sbr.rel (%p440) target = $region36
        $region35: #{tpu_custom_call.1} parent=11 // pred_region
          _
        $region36: #{tpu_custom_call.1} parent=11 // pred_fallthru
          _
        // Predicated region
        $region37: #{tpu_custom_call.1} parent=11 // pred_check
          %p443 = pneg %p204
        $region38: #{tpu_custom_call.1} parent=11 // pred_check_branch
          %445 = sbr.rel (%p443) target = $region40
        $region39: #{tpu_custom_call.1} parent=11 // pred_region
          %447 = vsyncadd [#allocation13], 0
          %s448 = sshll.u32 %s7, 4
          %s449 = int_to_ptr.hbm [resolvable:$true] %s448
          %s450 = sshll.u32 [#allocation14], 4
          %s451 = int_to_ptr.vmem [resolvable:$true] %s450
          %456 = dma.hbm_to_vmem [thread:$0]  %s449, 4096, %s451, [#allocation13], 128, 128, 8
        $region40: #{tpu_custom_call.1} parent=11 // pred_fallthru
          _
        // Predicated region
        $region41: #{tpu_custom_call.1} parent=11 // pred_check
          %p457 = pneg %p225
        $region42: #{tpu_custom_call.1} parent=11 // pred_check_branch
          %459 = sbr.rel (%p457) target = $region44
        $region43: #{tpu_custom_call.1} parent=11 // pred_region
          _
        $region44: #{tpu_custom_call.1} parent=11 // pred_fallthru
          _
        // Predicated region
        $region45: #{tpu_custom_call.1} parent=11 // pred_check
          %p460 = pneg %p246
        $region46: #{tpu_custom_call.1} parent=11 // pred_check_branch
          %462 = sbr.rel (%p460) target = $region48
        $region47: #{tpu_custom_call.1} parent=11 // pred_region
          %464 = vsyncadd [#allocation16], 0
          %s465 = sshll.u32 %s9, 4
          %s466 = int_to_ptr.hbm [resolvable:$true] %s465
          %s467 = sshll.u32 [#allocation15], 4
          %s468 = int_to_ptr.vmem [resolvable:$true] %s467
          %473 = dma.hbm_to_vmem [thread:$0]  %s466, 4096, %s468, [#allocation16], 128, 128, 8
        $region48: #{tpu_custom_call.1} parent=11 // pred_fallthru
          _
        // Predicated region
        $region49: #{tpu_custom_call.1} parent=11 // pred_check
          %p474 = pneg %p267
        $region50: #{tpu_custom_call.1} parent=11 // pred_check_branch
          %476 = sbr.rel (%p474) target = $region52
        $region51: #{tpu_custom_call.1} parent=11 // pred_region
          _
        $region52: #{tpu_custom_call.1} parent=11 // pred_fallthru
          _
        // Predicated region
        $region53: #{tpu_custom_call.1} parent=11 // pred_check
          %p477 = pneg %p288
        $region54: #{tpu_custom_call.1} parent=11 // pred_check_branch
          %479 = sbr.rel (%p477) target = $region56
        $region55: #{tpu_custom_call.1} parent=11 // pred_region
          %481 = vsyncadd [#allocation16], 0
          %s482 = sshll.u32 %s11, 4
          %s483 = int_to_ptr.hbm [resolvable:$true] %s482
          %s484 = sshll.u32 [#allocation17], 4
          %s485 = int_to_ptr.vmem [resolvable:$true] %s484
          %490 = dma.hbm_to_vmem [thread:$0]  %s483, 2048, %s485, [#allocation16], 128, 128, 8
        $region56: #{tpu_custom_call.1} parent=11 // pred_fallthru
          _
        // Predicated region
        $region57: #{tpu_custom_call.1} parent=11 // pred_check
          %p491 = pneg %p309
        $region58: #{tpu_custom_call.1} parent=11 // pred_check_branch
          %493 = sbr.rel (%p491) target = $region60
        $region59: #{tpu_custom_call.1} parent=11 // pred_region
          _
        $region60: #{tpu_custom_call.1} parent=11 // pred_fallthru
          _
        // Predicated region
        $region61: #{tpu_custom_call.1} parent=11 // pred_check
          %p494 = pneg %p330
        $region62: #{tpu_custom_call.1} parent=11 // pred_check_branch
          %496 = sbr.rel (%p494) target = $region64
        $region63: #{tpu_custom_call.1} parent=11 // pred_region
          %498 = vsyncadd [#allocation19], 0
          %s499 = sshll.u32 %s13, 4
          %s500 = int_to_ptr.hbm [resolvable:$true] %s499
          %s501 = sshll.u32 [#allocation18], 4
          %s502 = int_to_ptr.vmem [resolvable:$true] %s501
          %507 = dma.hbm_to_vmem [thread:$0]  %s500, 2048, %s502, [#allocation19], 128, 128, 8
        $region64: #{tpu_custom_call.1} parent=11 // pred_fallthru
          _
        // Predicated region
        $region65: #{tpu_custom_call.1} parent=11 // pred_check
          %p508 = pneg %p351
        $region66: #{tpu_custom_call.1} parent=11 // pred_check_branch
          %510 = sbr.rel (%p508) target = $region68
        $region67: #{tpu_custom_call.1} parent=11 // pred_region
          _
        $region68: #{tpu_custom_call.1} parent=11 // pred_fallthru
          _
      $region12: #{tpu_custom_call.1} parent=5 // pred_fallthru
        _
      %p511 = scmp.lt.s32.totalorder %s31, 2
      // Predicated region
      $region69: #{tpu_custom_call.1} parent=5 // pred_check
        %p512 = pneg %p511
      $region70: #{tpu_custom_call.1} parent=5 // pred_check_branch
        %514 = sbr.rel (%p512) target = $region72
      $region71: #{tpu_custom_call.1} parent=5 // pred_region
        // Predicated region
        $region73: #{tpu_custom_call.1} parent=71 // pred_check
          %p515 = pneg %p51
        $region74: #{tpu_custom_call.1} parent=71 // pred_check_branch
          %517 = sbr.rel (%p515) target = $region76
        $region75: #{tpu_custom_call.1} parent=71 // pred_region
          %s518 = sand.u32 %s41, 1
          %s519 = scalar_lea.sflag [#allocation7], %s518
          %s520 = sand.u32 %s41, 1
          %s521 = smul.addr %s520, 16
          %s522 = scalar_lea.vmem [#allocation6], %s521
          %524 = vsyncadd %s519, 0
          %s525 = smul.addr %s31, 2
          %s526 = smul.addr %s525, 8
          %s527 = scalar_lea.hbm %s0, %s526
          %s528 = sshll.u32 %s527, 4
          %s529 = int_to_ptr.hbm [resolvable:$true] %s528
          %s530 = sshll.u32 %s522, 4
          %s531 = int_to_ptr.vmem [resolvable:$true] %s530
          %536 = dma.hbm_to_vmem [thread:$0]  %s529, 256, %s531, %s519, 128, 128, 8
        $region76: #{tpu_custom_call.1} parent=71 // pred_fallthru
          _
      $region72: #{tpu_custom_call.1} parent=5 // pred_fallthru
        _
      %p537 = scmp.le.s32.totalorder 1, %s31
      %p538 = scmp.lt.s32.totalorder %s31, 3
      %p539 = pnand %p537, %p538
      %p540 = pneg %p539
      // Predicated region
      $region77: #{tpu_custom_call.1} parent=5 // pred_check
        _
      $region78: #{tpu_custom_call.1} parent=5 // pred_check_branch
        %542 = sbr.rel (%p539) target = $region80
      $region79: #{tpu_custom_call.1} parent=5 // pred_region
        %s543 = ssub.s32 %s31, 1
        %s544 = sand.u32 %s44, 1
        %s545 = scalar_lea.sflag [#allocation7], %s544
        %s546 = sand.u32 %s44, 1
        %s547 = smul.addr %s546, 16
        %s548 = scalar_lea.vmem [#allocation6], %s547
        // Predicated region
        $region81: #{tpu_custom_call.1} parent=79 // pred_check
          %p549 = pneg %p57
        $region82: #{tpu_custom_call.1} parent=79 // pred_check_branch
          %551 = sbr.rel (%p549) target = $region84
        $region83: #{tpu_custom_call.1} parent=79 // pred_region
          %553 = dma.done %s545, 256
        $region84: #{tpu_custom_call.1} parent=79 // pred_fallthru
          _
        // Predicated region
        $region85: #{tpu_custom_call.1} parent=79 // pred_check
          %p554 = pneg %p78
        $region86: #{tpu_custom_call.1} parent=79 // pred_check_branch
          %556 = sbr.rel (%p554) target = $region88
        $region87: #{tpu_custom_call.1} parent=79 // pred_region
          %558 = dma.done [#allocation10], 4096
        $region88: #{tpu_custom_call.1} parent=79 // pred_fallthru
          _
        // Predicated region
        $region89: #{tpu_custom_call.1} parent=79 // pred_check
          %p559 = pneg %p120
        $region90: #{tpu_custom_call.1} parent=79 // pred_check_branch
          %561 = sbr.rel (%p559) target = $region92
        $region91: #{tpu_custom_call.1} parent=79 // pred_region
          %563 = dma.done [#allocation10], 4096
        $region92: #{tpu_custom_call.1} parent=79 // pred_fallthru
          _
        // Predicated region
        $region93: #{tpu_custom_call.1} parent=79 // pred_check
          %p564 = pneg %p162
        $region94: #{tpu_custom_call.1} parent=79 // pred_check_branch
          %566 = sbr.rel (%p564) target = $region96
        $region95: #{tpu_custom_call.1} parent=79 // pred_region
          %568 = dma.done [#allocation13], 2048
        $region96: #{tpu_custom_call.1} parent=79 // pred_fallthru
          _
        // Predicated region
        $region97: #{tpu_custom_call.1} parent=79 // pred_check
          %p569 = pneg %p204
        $region98: #{tpu_custom_call.1} parent=79 // pred_check_branch
          %571 = sbr.rel (%p569) target = $region100
        $region99: #{tpu_custom_call.1} parent=79 // pred_region
          %573 = dma.done [#allocation13], 4096
        $region100: #{tpu_custom_call.1} parent=79 // pred_fallthru
          _
        // Predicated region
        $region101: #{tpu_custom_call.1} parent=79 // pred_check
          %p574 = pneg %p246
        $region102: #{tpu_custom_call.1} parent=79 // pred_check_branch
          %576 = sbr.rel (%p574) target = $region104
        $region103: #{tpu_custom_call.1} parent=79 // pred_region
          %578 = dma.done [#allocation16], 4096
        $region104: #{tpu_custom_call.1} parent=79 // pred_fallthru
          _
        // Predicated region
        $region105: #{tpu_custom_call.1} parent=79 // pred_check
          %p579 = pneg %p288
        $region106: #{tpu_custom_call.1} parent=79 // pred_check_branch
          %581 = sbr.rel (%p579) target = $region108
        $region107: #{tpu_custom_call.1} parent=79 // pred_region
          %583 = dma.done [#allocation16], 2048
        $region108: #{tpu_custom_call.1} parent=79 // pred_fallthru
          _
        // Predicated region
        $region109: #{tpu_custom_call.1} parent=79 // pred_check
          %p584 = pneg %p330
        $region110: #{tpu_custom_call.1} parent=79 // pred_check_branch
          %586 = sbr.rel (%p584) target = $region112
        $region111: #{tpu_custom_call.1} parent=79 // pred_region
          %588 = dma.done [#allocation19], 2048
        $region112: #{tpu_custom_call.1} parent=79 // pred_fallthru
          _
        %s589 = sand.u32 %s44, 1
        %s590 = scalar_lea.sflag [#allocation7], %s589
        %s591 = sand.u32 %s44, 1
        %s592 = smul.addr %s591, 16
        %s593 = scalar_lea.vmem [#allocation6], %s592
        %p594 = pneg %p57
        %p595 = pneg %p54
        %p596 = pneg %p78
        %p597 = pneg %p75
        %p598 = pneg %p99
        %p599 = pneg %p96
        %p600 = pneg %p120
        %p601 = pneg %p117
        %p602 = pneg %p141
        %p603 = pneg %p138
        %p604 = pneg %p162
        %p605 = pneg %p159
        %p606 = pneg %p183
        %p607 = pneg %p180
        %p608 = pneg %p204
        %p609 = pneg %p201
        %p610 = pneg %p225
        %p611 = pneg %p222
        %p612 = pneg %p246
        %p613 = pneg %p243
        %p614 = pneg %p267
        %p615 = pneg %p264
        %p616 = pneg %p288
        %p617 = pneg %p285
        %p618 = pneg %p309
        %p619 = pneg %p306
        %p620 = pneg %p330
        %p621 = pneg %p327
        %p622 = pneg %p351
        %p623 = pneg %p348
        %p624 = pneg %p377
        %p625 = pneg %p374
        %s626 = sand.u32 %s364, 1
        %s627 = scalar_lea.sflag [#allocation8], %s626
        %s628 = sand.u32 %s364, 1
        %s629 = scalar_lea.vmem [#allocation20], %s628
        %v630 = vld [vmem:[%s548] sm:$0xff]
        %v631 = vld [vmem:[%s548 + $0x8] sm:$0xff]
        %632 = vst [vmem:[#allocation2] sm:$0x1] 0.0
        %633 = vst [vmem:[#allocation2 + $0x1] sm:$0xff] %v630
        %634 = vst [vmem:[#allocation2 + $0x9] sm:$0xff] %v631
        %v635 = vld [vmem:[#allocation2] sm:$0xff]
        %v636 = vld [vmem:[#allocation2 + $0x8] sm:$0xff]
        %v637 = vld [vmem:[#allocation2 + $0x1] sm:$0xff]
        %v638 = vld [vmem:[#allocation2 + $0x9] sm:$0xff]
        %v639 = vld [vmem:[#allocation9] sm:$0xff]
        %v640 = vld [vmem:[#allocation9 + $0x8] sm:$0xff]
        %v641 = vld [vmem:[#allocation9 + $0x10] sm:$0xff]
        %v642 = vld [vmem:[#allocation9 + $0x18] sm:$0xff]
        %v643 = vld [vmem:[#allocation9 + $0x20] sm:$0xff]
        %v644 = vld [vmem:[#allocation9 + $0x28] sm:$0xff]
        %v645 = vld [vmem:[#allocation9 + $0x30] sm:$0xff]
        %v646 = vld [vmem:[#allocation9 + $0x38] sm:$0xff]
        %v647 = vld [vmem:[#allocation9 + $0x40] sm:$0xff]
        %v648 = vld [vmem:[#allocation9 + $0x48] sm:$0xff]
        %v649 = vld [vmem:[#allocation9 + $0x50] sm:$0xff]
        %v650 = vld [vmem:[#allocation9 + $0x58] sm:$0xff]
        %v651 = vld [vmem:[#allocation9 + $0x60] sm:$0xff]
        %v652 = vld [vmem:[#allocation9 + $0x68] sm:$0xff]
        %v653 = vld [vmem:[#allocation9 + $0x70] sm:$0xff]
        %v654 = vld [vmem:[#allocation9 + $0x78] sm:$0xff]
        %v655 = vld [vmem:[#allocation9 + $0x80] sm:$0xff]
        %v656 = vld [vmem:[#allocation9 + $0x88] sm:$0xff]
        %v657 = vld [vmem:[#allocation9 + $0x90] sm:$0xff]
        %v658 = vld [vmem:[#allocation9 + $0x98] sm:$0xff]
        %v659 = vld [vmem:[#allocation9 + $0xa0] sm:$0xff]
        %v660 = vld [vmem:[#allocation9 + $0xa8] sm:$0xff]
        %v661 = vld [vmem:[#allocation9 + $0xb0] sm:$0xff]
        %v662 = vld [vmem:[#allocation9 + $0xb8] sm:$0xff]
        %v663 = vld [vmem:[#allocation9 + $0xc0] sm:$0xff]
        %v664 = vld [vmem:[#allocation9 + $0xc8] sm:$0xff]
        %v665 = vld [vmem:[#allocation9 + $0xd0] sm:$0xff]
        %v666 = vld [vmem:[#allocation9 + $0xd8] sm:$0xff]
        %v667 = vld [vmem:[#allocation9 + $0xe0] sm:$0xff]
        %v668 = vld [vmem:[#allocation9 + $0xe8] sm:$0xff]
        %v669 = vld [vmem:[#allocation9 + $0xf0] sm:$0xff]
        %v670 = vld [vmem:[#allocation9 + $0xf8] sm:$0xff]
        %v671 = vld [vmem:[%s2] sm:$0x1]
        %v673 = vperm.slane %v671, 0
        %675 = vmatpush.msra.mxu0 %v654
        %676 = vmatpush.msra.mxu0 %v653
        %677 = vmatpush.msra.mxu0 %v652
        %678 = vmatpush.msra.mxu0 %v651
        %679 = vmatpush.msra.mxu0 %v650
        %680 = vmatpush.msra.mxu0 %v649
        %681 = vmatpush.msra.mxu0 %v648
        %682 = vmatpush.msra.mxu0 %v647
        %683 = vmatpush.msra.mxu0 %v646
        %684 = vmatpush.msra.mxu0 %v645
        %685 = vmatpush.msra.mxu0 %v644
        %686 = vmatpush.msra.mxu0 %v643
        %687 = vmatpush.msra.mxu0 %v642
        %688 = vmatpush.msra.mxu0 %v641
        %689 = vmatpush.msra.mxu0 %v640
        %690 = vmatpush.msra.mxu0 %v639
        %691 = vmatmul.f32.gmra.mxu0 %v635
        %v692 = vpop.f32.mrf.mxu0
        %v693 = vadd.f32 %v673, %v692
        %694 = vmatmul.f32.gmra.mxu0 %v636
        %v695 = vpop.f32.mrf.mxu0
        %v696 = vadd.f32 %v673, %v695
        %697 = vdwg.mxu0
        %698 = vmatpush.msra.mxu0 %v670
        %699 = vmatpush.msra.mxu0 %v669
        %700 = vmatpush.msra.mxu0 %v668
        %701 = vmatpush.msra.mxu0 %v667
        %702 = vmatpush.msra.mxu0 %v666
        %703 = vmatpush.msra.mxu0 %v665
        %704 = vmatpush.msra.mxu0 %v664
        %705 = vmatpush.msra.mxu0 %v663
        %706 = vmatpush.msra.mxu0 %v662
        %707 = vmatpush.msra.mxu0 %v661
        %708 = vmatpush.msra.mxu0 %v660
        %709 = vmatpush.msra.mxu0 %v659
        %710 = vmatpush.msra.mxu0 %v658
        %711 = vmatpush.msra.mxu0 %v657
        %712 = vmatpush.msra.mxu0 %v656
        %713 = vmatpush.msra.mxu0 %v655
        %714 = vmatmul.f32.gmra.mxu0 %v637
        %v715 = vpop.f32.mrf.mxu0
        %v716 = vadd.f32 %v693, %v715
        %717 = vmatmul.f32.gmra.mxu0 %v638
        %v718 = vpop.f32.mrf.mxu0
        %v719 = vadd.f32 %v696, %v718
        %720 = vdwg.mxu0
        %v721 = vmax.f32 %v716, 0.0
        %v722 = vmax.f32 %v719, 0.0
        %723 = vst [vmem:[#allocation3] sm:$0x1] 0.0
        %724 = vst [vmem:[#allocation3 + $0x1] sm:$0xff] %v721
        %725 = vst [vmem:[#allocation3 + $0x9] sm:$0xff] %v722
        %v726 = vld [vmem:[#allocation3] sm:$0xff]
        %v727 = vld [vmem:[#allocation3 + $0x8] sm:$0xff]
        %v728 = vld [vmem:[#allocation3 + $0x1] sm:$0xff]
        %v729 = vld [vmem:[#allocation3 + $0x9] sm:$0xff]
        %v730 = vld [vmem:[#allocation11] sm:$0xff]
        %v731 = vld [vmem:[#allocation11 + $0x8] sm:$0xff]
        %v732 = vld [vmem:[#allocation11 + $0x10] sm:$0xff]
        %v733 = vld [vmem:[#allocation11 + $0x18] sm:$0xff]
        %v734 = vld [vmem:[#allocation11 + $0x20] sm:$0xff]
        %v735 = vld [vmem:[#allocation11 + $0x28] sm:$0xff]
        %v736 = vld [vmem:[#allocation11 + $0x30] sm:$0xff]
        %v737 = vld [vmem:[#allocation11 + $0x38] sm:$0xff]
        %v738 = vld [vmem:[#allocation11 + $0x40] sm:$0xff]
        %v739 = vld [vmem:[#allocation11 + $0x48] sm:$0xff]
        %v740 = vld [vmem:[#allocation11 + $0x50] sm:$0xff]
        %v741 = vld [vmem:[#allocation11 + $0x58] sm:$0xff]
        %v742 = vld [vmem:[#allocation11 + $0x60] sm:$0xff]
        %v743 = vld [vmem:[#allocation11 + $0x68] sm:$0xff]
        %v744 = vld [vmem:[#allocation11 + $0x70] sm:$0xff]
        %v745 = vld [vmem:[#allocation11 + $0x78] sm:$0xff]
        %v746 = vld [vmem:[#allocation11 + $0x80] sm:$0xff]
        %v747 = vld [vmem:[#allocation11 + $0x88] sm:$0xff]
        %v748 = vld [vmem:[#allocation11 + $0x90] sm:$0xff]
        %v749 = vld [vmem:[#allocation11 + $0x98] sm:$0xff]
        %v750 = vld [vmem:[#allocation11 + $0xa0] sm:$0xff]
        %v751 = vld [vmem:[#allocation11 + $0xa8] sm:$0xff]
        %v752 = vld [vmem:[#allocation11 + $0xb0] sm:$0xff]
        %v753 = vld [vmem:[#allocation11 + $0xb8] sm:$0xff]
        %v754 = vld [vmem:[#allocation11 + $0xc0] sm:$0xff]
        %v755 = vld [vmem:[#allocation11 + $0xc8] sm:$0xff]
        %v756 = vld [vmem:[#allocation11 + $0xd0] sm:$0xff]
        %v757 = vld [vmem:[#allocation11 + $0xd8] sm:$0xff]
        %v758 = vld [vmem:[#allocation11 + $0xe0] sm:$0xff]
        %v759 = vld [vmem:[#allocation11 + $0xe8] sm:$0xff]
        %v760 = vld [vmem:[#allocation11 + $0xf0] sm:$0xff]
        %v761 = vld [vmem:[#allocation11 + $0xf8] sm:$0xff]
        %v762 = vld [vmem:[%s4] sm:$0x1]
        %v764 = vperm.slane %v762, 0
        %766 = vmatpush.msra.mxu0 %v745
        %767 = vmatpush.msra.mxu0 %v744
        %768 = vmatpush.msra.mxu0 %v743
        %769 = vmatpush.msra.mxu0 %v742
        %770 = vmatpush.msra.mxu0 %v741
        %771 = vmatpush.msra.mxu0 %v740
        %772 = vmatpush.msra.mxu0 %v739
        %773 = vmatpush.msra.mxu0 %v738
        %774 = vmatpush.msra.mxu0 %v737
        %775 = vmatpush.msra.mxu0 %v736
        %776 = vmatpush.msra.mxu0 %v735
        %777 = vmatpush.msra.mxu0 %v734
        %778 = vmatpush.msra.mxu0 %v733
        %779 = vmatpush.msra.mxu0 %v732
        %780 = vmatpush.msra.mxu0 %v731
        %781 = vmatpush.msra.mxu0 %v730
        %782 = vmatmul.f32.gmra.mxu0 %v726
        %v783 = vpop.f32.mrf.mxu0
        %v784 = vadd.f32 %v764, %v783
        %785 = vmatmul.f32.gmra.mxu0 %v727
        %v786 = vpop.f32.mrf.mxu0
        %v787 = vadd.f32 %v764, %v786
        %788 = vdwg.mxu0
        %789 = vmatpush.msra.mxu0 %v761
        %790 = vmatpush.msra.mxu0 %v760
        %791 = vmatpush.msra.mxu0 %v759
        %792 = vmatpush.msra.mxu0 %v758
        %793 = vmatpush.msra.mxu0 %v757
        %794 = vmatpush.msra.mxu0 %v756
        %795 = vmatpush.msra.mxu0 %v755
        %796 = vmatpush.msra.mxu0 %v754
        %797 = vmatpush.msra.mxu0 %v753
        %798 = vmatpush.msra.mxu0 %v752
        %799 = vmatpush.msra.mxu0 %v751
        %800 = vmatpush.msra.mxu0 %v750
        %801 = vmatpush.msra.mxu0 %v749
        %802 = vmatpush.msra.mxu0 %v748
        %803 = vmatpush.msra.mxu0 %v747
        %804 = vmatpush.msra.mxu0 %v746
        %805 = vmatmul.f32.gmra.mxu0 %v728
        %v806 = vpop.f32.mrf.mxu0
        %v807 = vadd.f32 %v784, %v806
        %808 = vmatmul.f32.gmra.mxu0 %v729
        %v809 = vpop.f32.mrf.mxu0
        %v810 = vadd.f32 %v787, %v809
        %811 = vdwg.mxu0
        %v812 = vmax.f32 %v807, 0.0
        %v813 = vmax.f32 %v810, 0.0
        %v814 = vld [vmem:[#allocation12] sm:$0xff]
        %v815 = vld [vmem:[#allocation12 + $0x8] sm:$0xff]
        %v816 = vld [vmem:[#allocation12 + $0x10] sm:$0xff]
        %v817 = vld [vmem:[#allocation12 + $0x18] sm:$0xff]
        %v818 = vld [vmem:[#allocation12 + $0x20] sm:$0xff]
        %v819 = vld [vmem:[#allocation12 + $0x28] sm:$0xff]
        %v820 = vld [vmem:[#allocation12 + $0x30] sm:$0xff]
        %v821 = vld [vmem:[#allocation12 + $0x38] sm:$0xff]
        %v822 = vld [vmem:[#allocation12 + $0x40] sm:$0xff]
        %v823 = vld [vmem:[#allocation12 + $0x48] sm:$0xff]
        %v824 = vld [vmem:[#allocation12 + $0x50] sm:$0xff]
        %v825 = vld [vmem:[#allocation12 + $0x58] sm:$0xff]
        %v826 = vld [vmem:[#allocation12 + $0x60] sm:$0xff]
        %v827 = vld [vmem:[#allocation12 + $0x68] sm:$0xff]
        %v828 = vld [vmem:[#allocation12 + $0x70] sm:$0xff]
        %v829 = vld [vmem:[#allocation12 + $0x78] sm:$0xff]
        %v830 = vld [vmem:[%s6] sm:$0x1]
        %v832 = vperm.slane %v830, 0
        %834 = vmatpush.msra.mxu0 %v829
        %835 = vmatpush.msra.mxu0 %v828
        %836 = vmatpush.msra.mxu0 %v827
        %837 = vmatpush.msra.mxu0 %v826
        %838 = vmatpush.msra.mxu0 %v825
        %839 = vmatpush.msra.mxu0 %v824
        %840 = vmatpush.msra.mxu0 %v823
        %841 = vmatpush.msra.mxu0 %v822
        %842 = vmatpush.msra.mxu0 %v821
        %843 = vmatpush.msra.mxu0 %v820
        %844 = vmatpush.msra.mxu0 %v819
        %845 = vmatpush.msra.mxu0 %v818
        %846 = vmatpush.msra.mxu0 %v817
        %847 = vmatpush.msra.mxu0 %v816
        %848 = vmatpush.msra.mxu0 %v815
        %849 = vmatpush.msra.mxu0 %v814
        %850 = vmatmul.f32.gmra.mxu0 %v630
        %v851 = vpop.f32.mrf.mxu0
        %v852 = vadd.f32 %v832, %v851
        %853 = vmatmul.f32.gmra.mxu0 %v631
        %v854 = vpop.f32.mrf.mxu0
        %v855 = vadd.f32 %v832, %v854
        %856 = vdwg.mxu0
        %v857 = vadd.f32 %v812, %v852
        %v858 = vadd.f32 %v813, %v855
        %v859 = vmax.f32 %v857, 0.0
        %v860 = vmax.f32 %v858, 0.0
        %861 = vst [vmem:[#allocation4] sm:$0x3] 0.0
        %862 = vst [vmem:[#allocation4 + $0x2] sm:$0xff] %v859
        %863 = vst [vmem:[#allocation4 + $0xa] sm:$0xff] %v860
        %v864 = vld [vmem:[#allocation4] sm:$0xff]
        %v865 = vld [vmem:[#allocation4 + $0x8] sm:$0xff]
        %v866 = vld [vmem:[#allocation4 + $0x2] sm:$0xff]
        %v867 = vld [vmem:[#allocation4 + $0xa] sm:$0xff]
        %v868 = vld [vmem:[#allocation14] sm:$0xff]
        %v869 = vld [vmem:[#allocation14 + $0x8] sm:$0xff]
        %v870 = vld [vmem:[#allocation14 + $0x10] sm:$0xff]
        %v871 = vld [vmem:[#allocation14 + $0x18] sm:$0xff]
        %v872 = vld [vmem:[#allocation14 + $0x20] sm:$0xff]
        %v873 = vld [vmem:[#allocation14 + $0x28] sm:$0xff]
        %v874 = vld [vmem:[#allocation14 + $0x30] sm:$0xff]
        %v875 = vld [vmem:[#allocation14 + $0x38] sm:$0xff]
        %v876 = vld [vmem:[#allocation14 + $0x40] sm:$0xff]
        %v877 = vld [vmem:[#allocation14 + $0x48] sm:$0xff]
        %v878 = vld [vmem:[#allocation14 + $0x50] sm:$0xff]
        %v879 = vld [vmem:[#allocation14 + $0x58] sm:$0xff]
        %v880 = vld [vmem:[#allocation14 + $0x60] sm:$0xff]
        %v881 = vld [vmem:[#allocation14 + $0x68] sm:$0xff]
        %v882 = vld [vmem:[#allocation14 + $0x70] sm:$0xff]
        %v883 = vld [vmem:[#allocation14 + $0x78] sm:$0xff]
        %v884 = vld [vmem:[#allocation14 + $0x80] sm:$0xff]
        %v885 = vld [vmem:[#allocation14 + $0x88] sm:$0xff]
        %v886 = vld [vmem:[#allocation14 + $0x90] sm:$0xff]
        %v887 = vld [vmem:[#allocation14 + $0x98] sm:$0xff]
        %v888 = vld [vmem:[#allocation14 + $0xa0] sm:$0xff]
        %v889 = vld [vmem:[#allocation14 + $0xa8] sm:$0xff]
        %v890 = vld [vmem:[#allocation14 + $0xb0] sm:$0xff]
        %v891 = vld [vmem:[#allocation14 + $0xb8] sm:$0xff]
        %v892 = vld [vmem:[#allocation14 + $0xc0] sm:$0xff]
        %v893 = vld [vmem:[#allocation14 + $0xc8] sm:$0xff]
        %v894 = vld [vmem:[#allocation14 + $0xd0] sm:$0xff]
        %v895 = vld [vmem:[#allocation14 + $0xd8] sm:$0xff]
        %v896 = vld [vmem:[#allocation14 + $0xe0] sm:$0xff]
        %v897 = vld [vmem:[#allocation14 + $0xe8] sm:$0xff]
        %v898 = vld [vmem:[#allocation14 + $0xf0] sm:$0xff]
        %v899 = vld [vmem:[#allocation14 + $0xf8] sm:$0xff]
        %v900 = vld [vmem:[%s8] sm:$0x1]
        %v902 = vperm.slane %v900, 0
        %904 = vmatpush.msra.mxu0 %v883
        %905 = vmatpush.msra.mxu0 %v882
        %906 = vmatpush.msra.mxu0 %v881
        %907 = vmatpush.msra.mxu0 %v880
        %908 = vmatpush.msra.mxu0 %v879
        %909 = vmatpush.msra.mxu0 %v878
        %910 = vmatpush.msra.mxu0 %v877
        %911 = vmatpush.msra.mxu0 %v876
        %912 = vmatpush.msra.mxu0 %v875
        %913 = vmatpush.msra.mxu0 %v874
        %914 = vmatpush.msra.mxu0 %v873
        %915 = vmatpush.msra.mxu0 %v872
        %916 = vmatpush.msra.mxu0 %v871
        %917 = vmatpush.msra.mxu0 %v870
        %918 = vmatpush.msra.mxu0 %v869
        %919 = vmatpush.msra.mxu0 %v868
        %920 = vmatmul.f32.gmra.mxu0 %v864
        %v921 = vpop.f32.mrf.mxu0
        %v922 = vadd.f32 %v902, %v921
        %923 = vmatmul.f32.gmra.mxu0 %v865
        %v924 = vpop.f32.mrf.mxu0
        %v925 = vadd.f32 %v902, %v924
        %926 = vdwg.mxu0
        %927 = vmatpush.msra.mxu0 %v899
        %928 = vmatpush.msra.mxu0 %v898
        %929 = vmatpush.msra.mxu0 %v897
        %930 = vmatpush.msra.mxu0 %v896
        %931 = vmatpush.msra.mxu0 %v895
        %932 = vmatpush.msra.mxu0 %v894
        %933 = vmatpush.msra.mxu0 %v893
        %934 = vmatpush.msra.mxu0 %v892
        %935 = vmatpush.msra.mxu0 %v891
        %936 = vmatpush.msra.mxu0 %v890
        %937 = vmatpush.msra.mxu0 %v889
        %938 = vmatpush.msra.mxu0 %v888
        %939 = vmatpush.msra.mxu0 %v887
        %940 = vmatpush.msra.mxu0 %v886
        %941 = vmatpush.msra.mxu0 %v885
        %942 = vmatpush.msra.mxu0 %v884
        %943 = vmatmul.f32.gmra.mxu0 %v866
        %v944 = vpop.f32.mrf.mxu0
        %v945 = vadd.f32 %v922, %v944
        %946 = vmatmul.f32.gmra.mxu0 %v867
        %v947 = vpop.f32.mrf.mxu0
        %v948 = vadd.f32 %v925, %v947
        %949 = vdwg.mxu0
        %v950 = vmax.f32 %v945, 0.0
        %v951 = vmax.f32 %v948, 0.0
        %952 = vst [vmem:[#allocation5] sm:$0x3] 0.0
        %953 = vst [vmem:[#allocation5 + $0x2] sm:$0xff] %v950
        %954 = vst [vmem:[#allocation5 + $0xa] sm:$0xff] %v951
        %v955 = vld [vmem:[#allocation5] sm:$0xff]
        %v956 = vld [vmem:[#allocation5 + $0x8] sm:$0xff]
        %v957 = vld [vmem:[#allocation5 + $0x2] sm:$0xff]
        %v958 = vld [vmem:[#allocation5 + $0xa] sm:$0xff]
        %v959 = vld [vmem:[#allocation15] sm:$0xff]
        %v960 = vld [vmem:[#allocation15 + $0x8] sm:$0xff]
        %v961 = vld [vmem:[#allocation15 + $0x10] sm:$0xff]
        %v962 = vld [vmem:[#allocation15 + $0x18] sm:$0xff]
        %v963 = vld [vmem:[#allocation15 + $0x20] sm:$0xff]
        %v964 = vld [vmem:[#allocation15 + $0x28] sm:$0xff]
        %v965 = vld [vmem:[#allocation15 + $0x30] sm:$0xff]
        %v966 = vld [vmem:[#allocation15 + $0x38] sm:$0xff]
        %v967 = vld [vmem:[#allocation15 + $0x40] sm:$0xff]
        %v968 = vld [vmem:[#allocation15 + $0x48] sm:$0xff]
        %v969 = vld [vmem:[#allocation15 + $0x50] sm:$0xff]
        %v970 = vld [vmem:[#allocation15 + $0x58] sm:$0xff]
        %v971 = vld [vmem:[#allocation15 + $0x60] sm:$0xff]
        %v972 = vld [vmem:[#allocation15 + $0x68] sm:$0xff]
        %v973 = vld [vmem:[#allocation15 + $0x70] sm:$0xff]
        %v974 = vld [vmem:[#allocation15 + $0x78] sm:$0xff]
        %v975 = vld [vmem:[#allocation15 + $0x80] sm:$0xff]
        %v976 = vld [vmem:[#allocation15 + $0x88] sm:$0xff]
        %v977 = vld [vmem:[#allocation15 + $0x90] sm:$0xff]
        %v978 = vld [vmem:[#allocation15 + $0x98] sm:$0xff]
        %v979 = vld [vmem:[#allocation15 + $0xa0] sm:$0xff]
        %v980 = vld [vmem:[#allocation15 + $0xa8] sm:$0xff]
        %v981 = vld [vmem:[#allocation15 + $0xb0] sm:$0xff]
        %v982 = vld [vmem:[#allocation15 + $0xb8] sm:$0xff]
        %v983 = vld [vmem:[#allocation15 + $0xc0] sm:$0xff]
        %v984 = vld [vmem:[#allocation15 + $0xc8] sm:$0xff]
        %v985 = vld [vmem:[#allocation15 + $0xd0] sm:$0xff]
        %v986 = vld [vmem:[#allocation15 + $0xd8] sm:$0xff]
        %v987 = vld [vmem:[#allocation15 + $0xe0] sm:$0xff]
        %v988 = vld [vmem:[#allocation15 + $0xe8] sm:$0xff]
        %v989 = vld [vmem:[#allocation15 + $0xf0] sm:$0xff]
        %v990 = vld [vmem:[#allocation15 + $0xf8] sm:$0xff]
        %v991 = vld [vmem:[%s10] sm:$0x1]
        %v993 = vperm.slane %v991, 0
        %995 = vmatpush.msra.mxu0 %v974
        %996 = vmatpush.msra.mxu0 %v973
        %997 = vmatpush.msra.mxu0 %v972
        %998 = vmatpush.msra.mxu0 %v971
        %999 = vmatpush.msra.mxu0 %v970
        %1000 = vmatpush.msra.mxu0 %v969
        %1001 = vmatpush.msra.mxu0 %v968
        %1002 = vmatpush.msra.mxu0 %v967
        %1003 = vmatpush.msra.mxu0 %v966
        %1004 = vmatpush.msra.mxu0 %v965
        %1005 = vmatpush.msra.mxu0 %v964
        %1006 = vmatpush.msra.mxu0 %v963
        %1007 = vmatpush.msra.mxu0 %v962
        %1008 = vmatpush.msra.mxu0 %v961
        %1009 = vmatpush.msra.mxu0 %v960
        %1010 = vmatpush.msra.mxu0 %v959
        %1011 = vmatmul.f32.gmra.mxu0 %v955
        %v1012 = vpop.f32.mrf.mxu0
        %1013 = vmatmul.f32.gmra.mxu0 %v956
        %v1014 = vpop.f32.mrf.mxu0
        %v1015 = vadd.f32 %v993, %v1014
        %1016 = vdwg.mxu0
        %1017 = vmatpush.msra.mxu0 %v990
        %1018 = vmatpush.msra.mxu0 %v989
        %1019 = vmatpush.msra.mxu0 %v988
        %1020 = vmatpush.msra.mxu0 %v987
        %1021 = vmatpush.msra.mxu0 %v986
        %1022 = vmatpush.msra.mxu0 %v985
        %1023 = vmatpush.msra.mxu0 %v984
        %1024 = vmatpush.msra.mxu0 %v983
        %1025 = vmatpush.msra.mxu0 %v982
        %1026 = vmatpush.msra.mxu0 %v981
        %1027 = vmatpush.msra.mxu0 %v980
        %1028 = vmatpush.msra.mxu0 %v979
        %1029 = vmatpush.msra.mxu0 %v978
        %1030 = vmatpush.msra.mxu0 %v977
        %1031 = vmatpush.msra.mxu0 %v976
        %1032 = vmatpush.msra.mxu0 %v975
        %1033 = vmatmul.f32.gmra.mxu0 %v957
        %v1034 = vpop.f32.mrf.mxu0
        %1035 = vmatmul.f32.gmra.mxu0 %v958
        %v1036 = vpop.f32.mrf.mxu0
        %v1037 = vadd.f32 %v1015, %v1036
        %1038 = vdwg.mxu0
        %v1039 = vmax.f32 %v1037, 0.0
        %v1040 = vld [vmem:[#allocation17] sm:$0xff]
        %v1041 = vld [vmem:[#allocation17 + $0x8] sm:$0xff]
        %v1042 = vld [vmem:[#allocation17 + $0x10] sm:$0xff]
        %v1043 = vld [vmem:[#allocation17 + $0x18] sm:$0xff]
        %v1044 = vld [vmem:[#allocation17 + $0x20] sm:$0xff]
        %v1045 = vld [vmem:[#allocation17 + $0x28] sm:$0xff]
        %v1046 = vld [vmem:[#allocation17 + $0x30] sm:$0xff]
        %v1047 = vld [vmem:[#allocation17 + $0x38] sm:$0xff]
        %v1048 = vld [vmem:[#allocation17 + $0x40] sm:$0xff]
        %v1049 = vld [vmem:[#allocation17 + $0x48] sm:$0xff]
        %v1050 = vld [vmem:[#allocation17 + $0x50] sm:$0xff]
        %v1051 = vld [vmem:[#allocation17 + $0x58] sm:$0xff]
        %v1052 = vld [vmem:[#allocation17 + $0x60] sm:$0xff]
        %v1053 = vld [vmem:[#allocation17 + $0x68] sm:$0xff]
        %v1054 = vld [vmem:[#allocation17 + $0x70] sm:$0xff]
        %v1055 = vld [vmem:[#allocation17 + $0x78] sm:$0xff]
        %v1056 = vld [vmem:[%s12] sm:$0x1]
        %v1058 = vperm.slane %v1056, 0
        %1060 = vmatpush.msra.mxu0 %v1055
        %1061 = vmatpush.msra.mxu0 %v1054
        %1062 = vmatpush.msra.mxu0 %v1053
        %1063 = vmatpush.msra.mxu0 %v1052
        %1064 = vmatpush.msra.mxu0 %v1051
        %1065 = vmatpush.msra.mxu0 %v1050
        %1066 = vmatpush.msra.mxu0 %v1049
        %1067 = vmatpush.msra.mxu0 %v1048
        %1068 = vmatpush.msra.mxu0 %v1047
        %1069 = vmatpush.msra.mxu0 %v1046
        %1070 = vmatpush.msra.mxu0 %v1045
        %1071 = vmatpush.msra.mxu0 %v1044
        %1072 = vmatpush.msra.mxu0 %v1043
        %1073 = vmatpush.msra.mxu0 %v1042
        %1074 = vmatpush.msra.mxu0 %v1041
        %1075 = vmatpush.msra.mxu0 %v1040
        %1076 = vmatmul.f32.gmra.mxu0 %v859
        %v1077 = vpop.f32.mrf.mxu0
        %1078 = vmatmul.f32.gmra.mxu0 %v860
        %v1079 = vpop.f32.mrf.mxu0
        %v1080 = vadd.f32 %v1058, %v1079
        %1081 = vdwg.mxu0
        %v1082 = vadd.f32 %v1039, %v1080
        %v1083 = vmax.f32 %v1082, 0.0
        %v1084 = vld [vmem:[#allocation18] sm:$0xff]
        %v1085 = vld [vmem:[#allocation18 + $0x8] sm:$0xff]
        %v1086 = vld [vmem:[#allocation18 + $0x10] sm:$0xff]
        %v1087 = vld [vmem:[#allocation18 + $0x18] sm:$0xff]
        %v1088 = vld [vmem:[#allocation18 + $0x20] sm:$0xff]
        %v1089 = vld [vmem:[#allocation18 + $0x28] sm:$0xff]
        %v1090 = vld [vmem:[#allocation18 + $0x30] sm:$0xff]
        %v1091 = vld [vmem:[#allocation18 + $0x38] sm:$0xff]
        %v1092 = vld [vmem:[#allocation18 + $0x40] sm:$0xff]
        %v1093 = vld [vmem:[#allocation18 + $0x48] sm:$0xff]
        %v1094 = vld [vmem:[#allocation18 + $0x50] sm:$0xff]
        %v1095 = vld [vmem:[#allocation18 + $0x58] sm:$0xff]
        %v1096 = vld [vmem:[#allocation18 + $0x60] sm:$0xff]
        %v1097 = vld [vmem:[#allocation18 + $0x68] sm:$0xff]
        %v1098 = vld [vmem:[#allocation18 + $0x70] sm:$0xff]
        %v1099 = vld [vmem:[#allocation18 + $0x78] sm:$0xff]
        %v1100 = vld [vmem:[%s14] sm:$0x1]
        %v1102 = vrot.slane %v1083, 7
        %1104 = vmatpush.msra.mxu0 %v1099
        %1105 = vmatpush.msra.mxu0 %v1098
        %1106 = vmatpush.msra.mxu0 %v1097
        %1107 = vmatpush.msra.mxu0 %v1096
        %1108 = vmatpush.msra.mxu0 %v1095
        %1109 = vmatpush.msra.mxu0 %v1094
        %1110 = vmatpush.msra.mxu0 %v1093
        %1111 = vmatpush.msra.mxu0 %v1092
        %1112 = vmatpush.msra.mxu0 %v1091
        %1113 = vmatpush.msra.mxu0 %v1090
        %1114 = vmatpush.msra.mxu0 %v1089
        %1115 = vmatpush.msra.mxu0 %v1088
        %1116 = vmatpush.msra.mxu0 %v1087
        %1117 = vmatpush.msra.mxu0 %v1086
        %1118 = vmatpush.msra.mxu0 %v1085
        %1119 = vmatpush.msra.mxu0 %v1084
        %1120 = vmatmul.f32.gmra.mxu0 %v1102
        %v1121 = vpop.f32.mrf.mxu0
        %v1122 = vadd.f32 %v1100, %v1121
        %1123 = vdwg.mxu0
        %1124 = vst [vmem:[%s629] sm:$0x1] %v1122
        %s1125 = sand.u32 %s364, 1
        %s1126 = scalar_lea.sflag [#allocation8], %s1125
        %s1127 = sand.u32 %s364, 1
        %s1128 = scalar_lea.vmem [#allocation20], %s1127
        // Predicated region
        $region113: #{tpu_custom_call.1} parent=79 // pred_check
          %p1129 = pneg %p374
        $region114: #{tpu_custom_call.1} parent=79 // pred_check_branch
          %1131 = sbr.rel (%p1129) target = $region116
        $region115: #{tpu_custom_call.1} parent=79 // pred_region
          %1133 = vsyncadd %s1126, 0
          %s1134 = scalar_lea.hbm %s15, %s36
          %s1136 = sshll.u32 %s1128, 4
          %s1137 = int_to_ptr.vmem [resolvable:$true] %s1136
          %s1138 = sshll.u32 %s1134, 4
          %s1139 = int_to_ptr.hbm [resolvable:$true] %s1138
          %1141 = dma.vmem_to_hbm [thread:$0]  %s1137, 16, %s1139, %s1126
        $region116: #{tpu_custom_call.1} parent=79 // pred_fallthru
          _
      $region80: #{tpu_custom_call.1} parent=5 // pred_fallthru
        _
      %p1142 = scmp.le.s32.totalorder 2, %s31
      // Predicated region
      $region117: #{tpu_custom_call.1} parent=5 // pred_check
        %p1143 = pneg %p1142
      $region118: #{tpu_custom_call.1} parent=5 // pred_check_branch
        %1145 = sbr.rel (%p1143) target = $region120
      $region119: #{tpu_custom_call.1} parent=5 // pred_region
        %s1146 = ssub.s32 %s31, 2
        // Predicated region
        $region121: #{tpu_custom_call.1} parent=119 // pred_check
          %p1147 = pneg %p380
        $region122: #{tpu_custom_call.1} parent=119 // pred_check_branch
          %1149 = sbr.rel (%p1147) target = $region124
        $region123: #{tpu_custom_call.1} parent=119 // pred_region
          %s1150 = sand.u32 %s365, 1
          %s1151 = scalar_lea.sflag [#allocation8], %s1150
          %s1152 = sand.u32 %s365, 1
          %s1153 = scalar_lea.vmem [#allocation20], %s1152
          %1155 = dma.done %s1151, 16
        $region124: #{tpu_custom_call.1} parent=119 // pred_fallthru
          _
      $region120: #{tpu_custom_call.1} parent=5 // pred_fallthru
        _
    $region6: #{tpu_custom_call.1} parent=1 // loop_footer
      %s35 = sadd.s32 1, %s31
    $region7: #{tpu_custom_call.1} parent=1 // loop_footer_branch
      %30 = sbr.rel target = $region3
    $region8: #{tpu_custom_call.1} parent=1 // loop_exit
      _
    %1156 = vsyncpa [#allocation7], 1
    %s1157 = scalar_lea.sflag [#allocation7], 1
    %1158 = vsyncpa %s1157, 1
    %1159 = vsyncpa [#allocation10], 1
    %1160 = vsyncpa [#allocation13], 1
    %1161 = vsyncpa [#allocation16], 1
    %1162 = vsyncpa [#allocation19], 1
    %1163 = vsyncpa [#allocation8], 1
    %s1164 = scalar_lea.sflag [#allocation8], 1
    %1165 = vsyncpa %s1164, 1

</llo_original>
